<compile_context>
chip_gen: v5e
topology: v5e:2x2
jax: 0.10.0
libtpu: 0.0.40
codegen_flags: <defaults>
</compile_context>

<pallas_src>
import functools
import math

import jax
import jax.numpy as jnp
from jax import lax
from jax.experimental import pallas as pl
from jax.experimental.pallas import tpu as pltpu


_MAX_TILE = 512  # tile along the long axis; multiple of both 8 (sublane) and 128 (lane)


# ---------------------------------------------------------------------------
# Pallas kernels
# ---------------------------------------------------------------------------
def _conv_pool_kernel(w_ref, b_ref, g0_ref, g1_ref, g2_ref, g3_ref, o_ref, *,
                      weights_lhs):
    """Fused conv-as-matmul + 2x2 maxpool + bias + ReLU.

    The four g*_refs are the im2col matrices of the four 2x2-pool offsets, so
    max(matmul(g0..g3)) is exactly MaxPool2d(2,2)(conv(x)); bias-add and ReLU
    commute with that max.

    weights_lhs=True : w [Cout, K], g [K, P]  -> out [Cout, P]  (channel-major)
    weights_lhs=False: w [K, Cout], g [P, K]  -> out [P, Cout]  (row-major)
    """
    def mm(g_ref):
        if weights_lhs:
            return jnp.dot(w_ref[...], g_ref[...],
                           preferred_element_type=jnp.float32)
        return jnp.dot(g_ref[...], w_ref[...],
                       preferred_element_type=jnp.float32)

    y = jnp.maximum(jnp.maximum(mm(g0_ref), mm(g1_ref)),
                    jnp.maximum(mm(g2_ref), mm(g3_ref)))
    y = y + b_ref[...]                       # bias broadcasts over the long axis
    o_ref[...] = jnp.maximum(y, 0.0).astype(o_ref.dtype)


def _fc_stack_kernel(x_ref, w1_ref, b1_ref, w2_ref, b2_ref, w3_ref, b3_ref, o_ref):
    """Fused Linear+ReLU -> Linear+ReLU -> Linear, all weights VMEM resident."""
    h = jnp.dot(x_ref[...], w1_ref[...], preferred_element_type=jnp.float32)
    h = jnp.maximum(h + b1_ref[...], 0.0)
    h = jnp.dot(h, w2_ref[...], preferred_element_type=jnp.float32)
    h = jnp.maximum(h + b2_ref[...], 0.0)
    y = jnp.dot(h, w3_ref[...], preferred_element_type=jnp.float32) + b3_ref[...]
    o_ref[...] = y.astype(o_ref.dtype)


# ---------------------------------------------------------------------------
# Pallas wrappers (tiled, "parallel" 1-D grid along the long axis)
# ---------------------------------------------------------------------------
def conv_pool_fused_t(w_t, b, groups):
    """conv+ReLU+pool, channel-major output [Cout, P]; groups are 4x [K, P]."""
    cout, k = w_t.shape
    p = groups[0].shape[1]
    tp = p if p <= _MAX_TILE else _MAX_TILE
    g_spec = pl.BlockSpec((k, tp), lambda i: (0, i))
    return pl.pallas_call(
        functools.partial(_conv_pool_kernel, weights_lhs=True),
        out_shape=jax.ShapeDtypeStruct((cout, p), jnp.float32),
        grid=(pl.cdiv(p, tp),),
        in_specs=[pl.BlockSpec((cout, k), lambda i: (0, 0)),
                  pl.BlockSpec((cout, 1), lambda i: (0, 0)),
                  g_spec, g_spec, g_spec, g_spec],
        out_specs=pl.BlockSpec((cout, tp), lambda i: (0, i)),
        compiler_params=pltpu.CompilerParams(dimension_semantics=("parallel",)),
    )(w_t, b.reshape(cout, 1), *groups)


def conv_pool_fused(w, b, groups):
    """conv+ReLU+pool, row-major output [P, Cout]; groups are 4x [P, K]."""
    k, cout = w.shape
    p = groups[0].shape[0]
    tp = p if p <= _MAX_TILE else _MAX_TILE
    g_spec = pl.BlockSpec((tp, k), lambda i: (i, 0))
    return pl.pallas_call(
        functools.partial(_conv_pool_kernel, weights_lhs=False),
        out_shape=jax.ShapeDtypeStruct((p, cout), jnp.float32),
        grid=(pl.cdiv(p, tp),),
        in_specs=[pl.BlockSpec((k, cout), lambda i: (0, 0)),
                  pl.BlockSpec((1, cout), lambda i: (0, 0)),
                  g_spec, g_spec, g_spec, g_spec],
        out_specs=pl.BlockSpec((tp, cout), lambda i: (i, 0)),
        compiler_params=pltpu.CompilerParams(dimension_semantics=("parallel",)),
    )(w, b.reshape(1, cout), *groups)


def fc_stack_fused(x, w1, b1, w2, b2, w3, b3):
    """x:[M,K] -> relu(x@w1+b1) -> relu(.@w2+b2) -> .@w3+b3, one kernel."""
    m, k = x.shape
    h0, h1, d = w1.shape[1], w2.shape[1], w3.shape[1]
    tm = m if m <= _MAX_TILE else _MAX_TILE
    return pl.pallas_call(
        _fc_stack_kernel,
        out_shape=jax.ShapeDtypeStruct((m, d), jnp.float32),
        grid=(pl.cdiv(m, tm),),
        in_specs=[pl.BlockSpec((tm, k), lambda i: (i, 0)),
                  pl.BlockSpec((k, h0), lambda i: (0, 0)),
                  pl.BlockSpec((1, h0), lambda i: (0, 0)),
                  pl.BlockSpec((h0, h1), lambda i: (0, 0)),
                  pl.BlockSpec((1, h1), lambda i: (0, 0)),
                  pl.BlockSpec((h1, d), lambda i: (0, 0)),
                  pl.BlockSpec((1, d), lambda i: (0, 0))],
        out_specs=pl.BlockSpec((tm, d), lambda i: (i, 0)),
        compiler_params=pltpu.CompilerParams(dimension_semantics=("parallel",)),
    )(x, w1, b1.reshape(1, h0), w2, b2.reshape(1, h1), w3, b3.reshape(1, d))


# ---------------------------------------------------------------------------
# XLA glue: stride-2 im2col "pool group" builders (fuse into the input copies)
# ---------------------------------------------------------------------------
def _pool_group_cols_t(x_nhwc, k):
    """NHWC input -> 4 transposed im2col groups [k*k*C, n*Hp*Wp].

    Group (pi, pj) covers conv-output positions (2hp+pi, 2wp+pj).
    Rows ordered (kh, kw, cin); columns ordered (n, hp, wp)."""
    n, h, w, c = x_nhwc.shape
    hp, wp = (h - k + 1) // 2, (w - k + 1) // 2
    groups = []
    for pi in range(2):
        for pj in range(2):
            slabs = [x_nhwc[:, pi + di: pi + di + 2 * hp - 1: 2,
                            pj + dj: pj + dj + 2 * wp - 1: 2, :]
                     for di in range(k) for dj in range(k)]      # each [n,hp,wp,c]
            pat = jnp.stack(slabs, axis=0)                        # [k*k, n, hp, wp, c]
            pat = jnp.transpose(pat, (0, 4, 1, 2, 3))             # [k*k, c, n, hp, wp]
            groups.append(pat.reshape(k * k * c, n * hp * wp))
    return groups, (hp, wp)


def _pool_group_cols_cmaj(f_cmaj, k):
    """Channel-major feature map [C, n, H, W] -> 4 im2col groups [n*Hp*Wp, k*k*C].

    Rows ordered (n, hp, wp); columns ordered (kh, kw, cin)."""
    c, n, h, w = f_cmaj.shape
    hp, wp = (h - k + 1) // 2, (w - k + 1) // 2
    groups = []
    for pi in range(2):
        for pj in range(2):
            slabs = [f_cmaj[:, :, pi + di: pi + di + 2 * hp - 1: 2,
                            pj + dj: pj + dj + 2 * wp - 1: 2]
                     for di in range(k) for dj in range(k)]      # each [c,n,hp,wp]
            pat = jnp.stack(slabs, axis=0)                        # [k*k, c, n, hp, wp]
            pat = jnp.transpose(pat, (2, 3, 4, 0, 1))             # [n, hp, wp, k*k, c]
            groups.append(pat.reshape(n * hp * wp, k * k * c))
    return groups, (hp, wp)


# ---------------------------------------------------------------------------
# Parameters: PyTorch-layout init + one-time conversion to kernel layout
# ---------------------------------------------------------------------------
def init_torch_params(key, in_channels=3, channels=(8, 8), h_dims=(32, 16), d_out=10):
    """PyTorch-like uniform(-1/sqrt(fan_in), 1/sqrt(fan_in)) init, torch layouts."""
    c0, c1 = channels
    h0, h1 = h_dims
    ks = jax.random.split(key, 10)

    def u(k, shape, fan_in):
        bound = 1.0 / math.sqrt(fan_in)
        return jax.random.uniform(k, shape, jnp.float32, -bound, bound)

    fc1_in = c1 * 5 * 5
    return {
        "conv1_w": u(ks[0], (c0, in_channels, 5, 5), in_channels * 25),
        "conv1_b": u(ks[1], (c0,), in_channels * 25),
        "conv2_w": u(ks[2], (c1, c0, 5, 5), c0 * 25),
        "conv2_b": u(ks[3], (c1,), c0 * 25),
        "fc1_w": u(ks[4], (h0, fc1_in), fc1_in), "fc1_b": u(ks[5], (h0,), fc1_in),
        "fc2_w": u(ks[6], (h1, h0), h0),         "fc2_b": u(ks[7], (h1,), h0),
        "fc3_w": u(ks[8], (d_out, h1), h1),      "fc3_b": u(ks[9], (d_out,), h1),
    }


def prepare_params(tp):
    """One-time layout plumbing: torch layouts -> kernel (matmul) layouts."""
    c0 = tp["conv1_w"].shape[0]
    c1 = tp["conv2_w"].shape[0]
    h0, fc1_in = tp["fc1_w"].shape
    return {
        # conv1: [C0, Cin, kh, kw] -> [C0, kh*kw*Cin]  (weights-LHS / transposed matmul)
        "w1t": jnp.transpose(tp["conv1_w"], (0, 2, 3, 1)).reshape(c0, -1),
        "b1": tp["conv1_b"],
        # conv2: [C1, C0, kh, kw] -> [kh*kw*C0, C1]
        "w2": jnp.transpose(tp["conv2_w"], (2, 3, 1, 0)).reshape(-1, c1),
        "b2": tp["conv2_b"],
        # fc1 rows permuted from PyTorch NCHW-flatten order (c,h,w) to (h,w,c) so the
        # NHWC-flattened conv2 output feeds it directly (no runtime transpose).
        "fc1_w": jnp.transpose(tp["fc1_w"].reshape(h0, c1, 5, 5),
                               (2, 3, 1, 0)).reshape(fc1_in, h0),
        "fc1_b": tp["fc1_b"],
        "fc2_w": tp["fc2_w"].T, "fc2_b": tp["fc2_b"],
        "fc3_w": tp["fc3_w"].T, "fc3_b": tp["fc3_b"],
    }


# ---------------------------------------------------------------------------
# Forward pass (3 fused Pallas kernels)
# ---------------------------------------------------------------------------
@jax.jit
def seqconvnet_forward(x_nchw, params):
    x = jnp.transpose(x_nchw, (0, 2, 3, 1)).astype(jnp.float32)   # NCHW -> NHWC
    n = x.shape[0]
    c0 = params["w1t"].shape[0]
    c1 = params["w2"].shape[1]

    # conv1 + ReLU + 2x2 maxpool, one kernel; channel-major (lane-dense) output.
    groups1, (hp1, wp1) = _pool_group_cols_t(x, 5)
    f1 = conv_pool_fused_t(params["w1t"], params["b1"], groups1)   # [C0, n*hp1*wp1]
    f1 = f1.reshape(c0, n, hp1, wp1)                                # free reshape

    # conv2 + ReLU + 2x2 maxpool, one kernel; row-major (n,hp,wp,c) output.
    groups2, (hp2, wp2) = _pool_group_cols_cmaj(f1, 5)
    f2 = conv_pool_fused(params["w2"], params["b2"], groups2)       # [n*hp2*wp2, C1]

    # Flatten: free reshape (fc1 weight rows are pre-permuted to (h,w,c) order).
    fc_in = f2.reshape(n, hp2 * wp2 * c1)

    # fc1+ReLU -> fc2+ReLU -> final_fc, one kernel (dropout / bn are identity).
    return fc_stack_fused(fc_in,
                          params["fc1_w"], params["fc1_b"],
                          params["fc2_w"], params["fc2_b"],
                          params["fc3_w"], params["fc3_b"])


# ---------------------------------------------------------------------------
# Pure-JAX reference (mirrors the PyTorch module exactly) for a self-check
# ---------------------------------------------------------------------------
@jax.jit
def reference_forward(x_nchw, tp):
    dn = ("NCHW", "OIHW", "NCHW")

    def conv(x, w, b):
        y = lax.conv_general_dilated(x, w, (1, 1), "VALID", dimension_numbers=dn)
        return y + b[None, :, None, None]

    def pool(x):
        n, c, h, w = x.shape
        x = x[:, :, : (h // 2) * 2, : (w // 2) * 2]
        return x.reshape(n, c, h // 2, 2, w // 2, 2).max(axis=(3, 5))

    y = pool(jnp.maximum(conv(x_nchw, tp["conv1_w"], tp["conv1_b"]), 0.0))
    y = pool(jnp.maximum(conv(y, tp["conv2_w"], tp["conv2_b"]), 0.0))
    y = y.reshape(y.shape[0], -1)                                  # NCHW flatten
    y = jnp.maximum(y @ tp["fc1_w"].T + tp["fc1_b"], 0.0)
    y = jnp.maximum(y @ tp["fc2_w"].T + tp["fc2_b"], 0.0)
    return y @ tp["fc3_w"].T + tp["fc3_b"]


if __name__ == "__main__":
    key = jax.random.PRNGKey(0)
    k_x, k_p = jax.random.split(key)

    # Small config: in_channels=3, channels=(8,8), h_dims=(32,16), D_out=10.
    # Spatial must be 32x32 so the conv/pool stack yields 5x5 (FC sizes require it).
    batch, in_ch, hw = 2, 3, 32
    x = jax.random.normal(k_x, (batch, in_ch, hw, hw), dtype=jnp.float32)

    torch_params = init_torch_params(k_p, in_channels=in_ch, channels=(8, 8),
                                     h_dims=(32, 16), d_out=10)
    params = prepare_params(torch_params)

    out = seqconvnet_forward(x, params)
    jax.block_until_ready(out)
    assert out.shape == (batch, 10), out.shape

    # Numerical self-check against the pure-JAX reference (loose tolerance:
    # MXU f32 matmuls / XLA convs may use reduced-precision passes by default).
    ref = reference_forward(x, torch_params)
    err = float(jnp.max(jnp.abs(out - ref)))
    assert err < 2e-2, f"mismatch vs reference: max|diff|={err}"

    print("KERNEL_OK")
</pallas_src>

<mosaic_0001>
module attributes {stable_mosaic.version = 11 : i64} {
  func.func @_conv_pool_kernel(%arg0: i32, %arg1: memref<8x75xf32, #tpu.memory_space<vmem>>, %arg2: memref<8x1xf32, #tpu.memory_space<vmem>>, %arg3: memref<75x392xf32, #tpu.memory_space<vmem>>, %arg4: memref<75x392xf32, #tpu.memory_space<vmem>>, %arg5: memref<75x392xf32, #tpu.memory_space<vmem>>, %arg6: memref<75x392xf32, #tpu.memory_space<vmem>>, %arg7: memref<8x392xf32, #tpu.memory_space<vmem>>) attributes {dimension_semantics = [#tpu.dimension_semantics<parallel>], iteration_bounds = array<i64: 1>, scalar_prefetch = 0 : i64, scratch_operands = 0 : i64, tpu.core_type = #tpu.core_type<tc>, window_params = [{pipeline_mode = #tpu.pipeline_mode<synchronous>, transform_indices = @transform_0, window_bounds = array<i64: 8, 75>}, {pipeline_mode = #tpu.pipeline_mode<synchronous>, transform_indices = @transform_1, window_bounds = array<i64: 8, 1>}, {transform_indices = @transform_2, window_bounds = array<i64: 75, 392>}, {transform_indices = @transform_3, window_bounds = array<i64: 75, 392>}, {transform_indices = @transform_4, window_bounds = array<i64: 75, 392>}, {transform_indices = @transform_5, window_bounds = array<i64: 75, 392>}, {transform_indices = @transform_6, window_bounds = array<i64: 8, 392>}]} {
    %c0 = arith.constant 0 : index
    %c0_0 = arith.constant 0 : index
    %0 = vector.load %arg1[%c0, %c0_0] : memref<8x75xf32, #tpu.memory_space<vmem>>, vector<8x75xf32>
    %c0_1 = arith.constant 0 : index
    %c0_2 = arith.constant 0 : index
    %1 = vector.load %arg3[%c0_1, %c0_2] : memref<75x392xf32, #tpu.memory_space<vmem>>, vector<75x392xf32>
    %cst = arith.constant dense<0.000000e+00> : vector<8x392xf32>
    %2 = tpu.matmul %0, %1, %cst {dimension_numbers = #tpu.dot_dimension_numbers<[1], [0], [0], [1], [0, 0, 1, 1], [], []>} : vector<8x75xf32>, vector<75x392xf32>, vector<8x392xf32> -> vector<8x392xf32>
    %c0_3 = arith.constant 0 : index
    %c0_4 = arith.constant 0 : index
    %3 = vector.load %arg1[%c0_3, %c0_4] : memref<8x75xf32, #tpu.memory_space<vmem>>, vector<8x75xf32>
    %c0_5 = arith.constant 0 : index
    %c0_6 = arith.constant 0 : index
    %4 = vector.load %arg4[%c0_5, %c0_6] : memref<75x392xf32, #tpu.memory_space<vmem>>, vector<75x392xf32>
    %cst_7 = arith.constant dense<0.000000e+00> : vector<8x392xf32>
    %5 = tpu.matmul %3, %4, %cst_7 {dimension_numbers = #tpu.dot_dimension_numbers<[1], [0], [0], [1], [0, 0, 1, 1], [], []>} : vector<8x75xf32>, vector<75x392xf32>, vector<8x392xf32> -> vector<8x392xf32>
    %6 = arith.maximumf %2, %5 : vector<8x392xf32>
    %c0_8 = arith.constant 0 : index
    %c0_9 = arith.constant 0 : index
    %7 = vector.load %arg1[%c0_8, %c0_9] : memref<8x75xf32, #tpu.memory_space<vmem>>, vector<8x75xf32>
    %c0_10 = arith.constant 0 : index
    %c0_11 = arith.constant 0 : index
    %8 = vector.load %arg5[%c0_10, %c0_11] : memref<75x392xf32, #tpu.memory_space<vmem>>, vector<75x392xf32>
    %cst_12 = arith.constant dense<0.000000e+00> : vector<8x392xf32>
    %9 = tpu.matmul %7, %8, %cst_12 {dimension_numbers = #tpu.dot_dimension_numbers<[1], [0], [0], [1], [0, 0, 1, 1], [], []>} : vector<8x75xf32>, vector<75x392xf32>, vector<8x392xf32> -> vector<8x392xf32>
    %c0_13 = arith.constant 0 : index
    %c0_14 = arith.constant 0 : index
    %10 = vector.load %arg1[%c0_13, %c0_14] : memref<8x75xf32, #tpu.memory_space<vmem>>, vector<8x75xf32>
    %c0_15 = arith.constant 0 : index
    %c0_16 = arith.constant 0 : index
    %11 = vector.load %arg6[%c0_15, %c0_16] : memref<75x392xf32, #tpu.memory_space<vmem>>, vector<75x392xf32>
    %cst_17 = arith.constant dense<0.000000e+00> : vector<8x392xf32>
    %12 = tpu.matmul %10, %11, %cst_17 {dimension_numbers = #tpu.dot_dimension_numbers<[1], [0], [0], [1], [0, 0, 1, 1], [], []>} : vector<8x75xf32>, vector<75x392xf32>, vector<8x392xf32> -> vector<8x392xf32>
    %13 = arith.maximumf %9, %12 : vector<8x392xf32>
    %14 = arith.maximumf %6, %13 : vector<8x392xf32>
    %c0_18 = arith.constant 0 : index
    %c0_19 = arith.constant 0 : index
    %15 = vector.load %arg2[%c0_18, %c0_19] : memref<8x1xf32, #tpu.memory_space<vmem>>, vector<8x1xf32>
    %16 = vector.broadcast %15 : vector<8x1xf32> to vector<8x392xf32>
    %17 = arith.addf %14, %16 : vector<8x392xf32>
    %cst_20 = arith.constant 0.000000e+00 : f32
    %18 = vector.broadcast %cst_20 : f32 to vector<8x392xf32>
    %19 = arith.maximumf %17, %18 : vector<8x392xf32>
    %c0_21 = arith.constant 0 : index
    %c0_22 = arith.constant 0 : index
    %20 = vector.load %arg7[%c0_21, %c0_22] : memref<8x392xf32, #tpu.memory_space<vmem>>, vector<8x392xf32>
    tpu.vector_store %arg7[%c0_21, %c0_22], %19 {strides = array<i32>} : memref<8x392xf32, #tpu.memory_space<vmem>>, vector<8x392xf32>,
    return
  }
  func.func @transform_0(%arg0: i32) -> (i32, i32) {
    %c0_i32 = arith.constant 0 : i32
    %c0_i32_0 = arith.constant 0 : i32
    %c0_i32_1 = arith.constant 0 : i32
    return %c0_i32, %c0_i32_0 : i32, i32
  }
  func.func @transform_1(%arg0: i32) -> (i32, i32) {
    %c0_i32 = arith.constant 0 : i32
    %c0_i32_0 = arith.constant 0 : i32
    %c0_i32_1 = arith.constant 0 : i32
    return %c0_i32, %c0_i32_0 : i32, i32
  }
  func.func @transform_2(%arg0: i32) -> (i32, i32) {
    %c0_i32 = arith.constant 0 : i32
    %c0_i32_0 = arith.constant 0 : i32
    return %c0_i32, %arg0 : i32, i32
  }
  func.func @transform_3(%arg0: i32) -> (i32, i32) {
    %c0_i32 = arith.constant 0 : i32
    %c0_i32_0 = arith.constant 0 : i32
    return %c0_i32, %arg0 : i32, i32
  }
  func.func @transform_4(%arg0: i32) -> (i32, i32) {
    %c0_i32 = arith.constant 0 : i32
    %c0_i32_0 = arith.constant 0 : i32
    return %c0_i32, %arg0 : i32, i32
  }
  func.func @transform_5(%arg0: i32) -> (i32, i32) {
    %c0_i32 = arith.constant 0 : i32
    %c0_i32_0 = arith.constant 0 : i32
    return %c0_i32, %arg0 : i32, i32
  }
  func.func @transform_6(%arg0: i32) -> (i32, i32) {
    %c0_i32 = arith.constant 0 : i32
    %c0_i32_0 = arith.constant 0 : i32
    return %c0_i32, %arg0 : i32, i32
  }
}

module attributes {stable_mosaic.version = 11 : i64} {
  func.func @_conv_pool_kernel(%arg0: i32, %arg1: memref<200x8xf32, #tpu.memory_space<vmem>>, %arg2: memref<1x8xf32, #tpu.memory_space<vmem>>, %arg3: memref<50x200xf32, #tpu.memory_space<vmem>>, %arg4: memref<50x200xf32, #tpu.memory_space<vmem>>, %arg5: memref<50x200xf32, #tpu.memory_space<vmem>>, %arg6: memref<50x200xf32, #tpu.memory_space<vmem>>, %arg7: memref<50x8xf32, #tpu.memory_space<vmem>>) attributes {dimension_semantics = [#tpu.dimension_semantics<parallel>], iteration_bounds = array<i64: 1>, scalar_prefetch = 0 : i64, scratch_operands = 0 : i64, tpu.core_type = #tpu.core_type<tc>, window_params = [{pipeline_mode = #tpu.pipeline_mode<synchronous>, transform_indices = @transform_0, window_bounds = array<i64: 200, 8>}, {pipeline_mode = #tpu.pipeline_mode<synchronous>, transform_indices = @transform_1, window_bounds = array<i64: 1, 8>}, {transform_indices = @transform_2, window_bounds = array<i64: 50, 200>}, {transform_indices = @transform_3, window_bounds = array<i64: 50, 200>}, {transform_indices = @transform_4, window_bounds = array<i64: 50, 200>}, {transform_indices = @transform_5, window_bounds = array<i64: 50, 200>}, {transform_indices = @transform_6, window_bounds = array<i64: 50, 8>}]} {
    %c0 = arith.constant 0 : index
    %c0_0 = arith.constant 0 : index
    %0 = vector.load %arg3[%c0, %c0_0] : memref<50x200xf32, #tpu.memory_space<vmem>>, vector<50x200xf32>
    %c0_1 = arith.constant 0 : index
    %c0_2 = arith.constant 0 : index
    %1 = vector.load %arg1[%c0_1, %c0_2] : memref<200x8xf32, #tpu.memory_space<vmem>>, vector<200x8xf32>
    %cst = arith.constant dense<0.000000e+00> : vector<50x8xf32>
    %2 = tpu.matmul %0, %1, %cst {dimension_numbers = #tpu.dot_dimension_numbers<[1], [0], [0], [1], [0, 0, 1, 1], [], []>} : vector<50x200xf32>, vector<200x8xf32>, vector<50x8xf32> -> vector<50x8xf32>
    %c0_3 = arith.constant 0 : index
    %c0_4 = arith.constant 0 : index
    %3 = vector.load %arg4[%c0_3, %c0_4] : memref<50x200xf32, #tpu.memory_space<vmem>>, vector<50x200xf32>
    %c0_5 = arith.constant 0 : index
    %c0_6 = arith.constant 0 : index
    %4 = vector.load %arg1[%c0_5, %c0_6] : memref<200x8xf32, #tpu.memory_space<vmem>>, vector<200x8xf32>
    %cst_7 = arith.constant dense<0.000000e+00> : vector<50x8xf32>
    %5 = tpu.matmul %3, %4, %cst_7 {dimension_numbers = #tpu.dot_dimension_numbers<[1], [0], [0], [1], [0, 0, 1, 1], [], []>} : vector<50x200xf32>, vector<200x8xf32>, vector<50x8xf32> -> vector<50x8xf32>
    %6 = arith.maximumf %2, %5 : vector<50x8xf32>
    %c0_8 = arith.constant 0 : index
    %c0_9 = arith.constant 0 : index
    %7 = vector.load %arg5[%c0_8, %c0_9] : memref<50x200xf32, #tpu.memory_space<vmem>>, vector<50x200xf32>
    %c0_10 = arith.constant 0 : index
    %c0_11 = arith.constant 0 : index
    %8 = vector.load %arg1[%c0_10, %c0_11] : memref<200x8xf32, #tpu.memory_space<vmem>>, vector<200x8xf32>
    %cst_12 = arith.constant dense<0.000000e+00> : vector<50x8xf32>
    %9 = tpu.matmul %7, %8, %cst_12 {dimension_numbers = #tpu.dot_dimension_numbers<[1], [0], [0], [1], [0, 0, 1, 1], [], []>} : vector<50x200xf32>, vector<200x8xf32>, vector<50x8xf32> -> vector<50x8xf32>
    %c0_13 = arith.constant 0 : index
    %c0_14 = arith.constant 0 : index
    %10 = vector.load %arg6[%c0_13, %c0_14] : memref<50x200xf32, #tpu.memory_space<vmem>>, vector<50x200xf32>
    %c0_15 = arith.constant 0 : index
    %c0_16 = arith.constant 0 : index
    %11 = vector.load %arg1[%c0_15, %c0_16] : memref<200x8xf32, #tpu.memory_space<vmem>>, vector<200x8xf32>
    %cst_17 = arith.constant dense<0.000000e+00> : vector<50x8xf32>
    %12 = tpu.matmul %10, %11, %cst_17 {dimension_numbers = #tpu.dot_dimension_numbers<[1], [0], [0], [1], [0, 0, 1, 1], [], []>} : vector<50x200xf32>, vector<200x8xf32>, vector<50x8xf32> -> vector<50x8xf32>
    %13 = arith.maximumf %9, %12 : vector<50x8xf32>
    %14 = arith.maximumf %6, %13 : vector<50x8xf32>
    %c0_18 = arith.constant 0 : index
    %c0_19 = arith.constant 0 : index
    %15 = vector.load %arg2[%c0_18, %c0_19] : memref<1x8xf32, #tpu.memory_space<vmem>>, vector<1x8xf32>
    %16 = vector.broadcast %15 : vector<1x8xf32> to vector<50x8xf32>
    %17 = arith.addf %14, %16 : vector<50x8xf32>
    %cst_20 = arith.constant 0.000000e+00 : f32
    %18 = vector.broadcast %cst_20 : f32 to vector<50x8xf32>
    %19 = arith.maximumf %17, %18 : vector<50x8xf32>
    %c0_21 = arith.constant 0 : index
    %c0_22 = arith.constant 0 : index
    %20 = vector.load %arg7[%c0_21, %c0_22] : memref<50x8xf32, #tpu.memory_space<vmem>>, vector<50x8xf32>
    tpu.vector_store %arg7[%c0_21, %c0_22], %19 {strides = array<i32>} : memref<50x8xf32, #tpu.memory_space<vmem>>, vector<50x8xf32>,
    return
  }
  func.func @transform_0(%arg0: i32) -> (i32, i32) {
    %c0_i32 = arith.constant 0 : i32
    %c0_i32_0 = arith.constant 0 : i32
    %c0_i32_1 = arith.constant 0 : i32
    return %c0_i32, %c0_i32_0 : i32, i32
  }
  func.func @transform_1(%arg0: i32) -> (i32, i32) {
    %c0_i32 = arith.constant 0 : i32
    %c0_i32_0 = arith.constant 0 : i32
    %c0_i32_1 = arith.constant 0 : i32
    return %c0_i32, %c0_i32_0 : i32, i32
  }
  func.func @transform_2(%arg0: i32) -> (i32, i32) {
    %c0_i32 = arith.constant 0 : i32
    %c0_i32_0 = arith.constant 0 : i32
    return %arg0, %c0_i32 : i32, i32
  }
  func.func @transform_3(%arg0: i32) -> (i32, i32) {
    %c0_i32 = arith.constant 0 : i32
    %c0_i32_0 = arith.constant 0 : i32
    return %arg0, %c0_i32 : i32, i32
  }
  func.func @transform_4(%arg0: i32) -> (i32, i32) {
    %c0_i32 = arith.constant 0 : i32
    %c0_i32_0 = arith.constant 0 : i32
    return %arg0, %c0_i32 : i32, i32
  }
  func.func @transform_5(%arg0: i32) -> (i32, i32) {
    %c0_i32 = arith.constant 0 : i32
    %c0_i32_0 = arith.constant 0 : i32
    return %arg0, %c0_i32 : i32, i32
  }
  func.func @transform_6(%arg0: i32) -> (i32, i32) {
    %c0_i32 = arith.constant 0 : i32
    %c0_i32_0 = arith.constant 0 : i32
    return %arg0, %c0_i32 : i32, i32
  }
}

module attributes {stable_mosaic.version = 11 : i64} {
  func.func @_fc_stack_kernel(%arg0: i32, %arg1: memref<2x200xf32, #tpu.memory_space<vmem>>, %arg2: memref<200x32xf32, #tpu.memory_space<vmem>>, %arg3: memref<1x32xf32, #tpu.memory_space<vmem>>, %arg4: memref<32x16xf32, #tpu.memory_space<vmem>>, %arg5: memref<1x16xf32, #tpu.memory_space<vmem>>, %arg6: memref<16x10xf32, #tpu.memory_space<vmem>>, %arg7: memref<1x10xf32, #tpu.memory_space<vmem>>, %arg8: memref<2x10xf32, #tpu.memory_space<vmem>>) attributes {dimension_semantics = [#tpu.dimension_semantics<parallel>], iteration_bounds = array<i64: 1>, scalar_prefetch = 0 : i64, scratch_operands = 0 : i64, tpu.core_type = #tpu.core_type<tc>, window_params = [{transform_indices = @transform_0, window_bounds = array<i64: 2, 200>}, {pipeline_mode = #tpu.pipeline_mode<synchronous>, transform_indices = @transform_1, window_bounds = array<i64: 200, 32>}, {pipeline_mode = #tpu.pipeline_mode<synchronous>, transform_indices = @transform_2, window_bounds = array<i64: 1, 32>}, {pipeline_mode = #tpu.pipeline_mode<synchronous>, transform_indices = @transform_3, window_bounds = array<i64: 32, 16>}, {pipeline_mode = #tpu.pipeline_mode<synchronous>, transform_indices = @transform_4, window_bounds = array<i64: 1, 16>}, {pipeline_mode = #tpu.pipeline_mode<synchronous>, transform_indices = @transform_5, window_bounds = array<i64: 16, 10>}, {pipeline_mode = #tpu.pipeline_mode<synchronous>, transform_indices = @transform_6, window_bounds = array<i64: 1, 10>}, {transform_indices = @transform_7, window_bounds = array<i64: 2, 10>}]} {
    %c0 = arith.constant 0 : index
    %c0_0 = arith.constant 0 : index
    %0 = vector.load %arg1[%c0, %c0_0] : memref<2x200xf32, #tpu.memory_space<vmem>>, vector<2x200xf32>
    %c0_1 = arith.constant 0 : index
    %c0_2 = arith.constant 0 : index
    %1 = vector.load %arg2[%c0_1, %c0_2] : memref<200x32xf32, #tpu.memory_space<vmem>>, vector<200x32xf32>
    %cst = arith.constant dense<0.000000e+00> : vector<2x32xf32>
    %2 = tpu.matmul %0, %1, %cst {dimension_numbers = #tpu.dot_dimension_numbers<[1], [0], [0], [1], [0, 0, 1, 1], [], []>} : vector<2x200xf32>, vector<200x32xf32>, vector<2x32xf32> -> vector<2x32xf32>
    %c0_3 = arith.constant 0 : index
    %c0_4 = arith.constant 0 : index
    %3 = vector.load %arg3[%c0_3, %c0_4] : memref<1x32xf32, #tpu.memory_space<vmem>>, vector<1x32xf32>
    %4 = vector.broadcast %3 : vector<1x32xf32> to vector<2x32xf32>
    %5 = arith.addf %2, %4 : vector<2x32xf32>
    %cst_5 = arith.constant 0.000000e+00 : f32
    %6 = vector.broadcast %cst_5 : f32 to vector<2x32xf32>
    %7 = arith.maximumf %5, %6 : vector<2x32xf32>
    %c0_6 = arith.constant 0 : index
    %c0_7 = arith.constant 0 : index
    %8 = vector.load %arg4[%c0_6, %c0_7] : memref<32x16xf32, #tpu.memory_space<vmem>>, vector<32x16xf32>
    %cst_8 = arith.constant dense<0.000000e+00> : vector<2x16xf32>
    %9 = tpu.matmul %7, %8, %cst_8 {dimension_numbers = #tpu.dot_dimension_numbers<[1], [0], [0], [1], [0, 0, 1, 1], [], []>} : vector<2x32xf32>, vector<32x16xf32>, vector<2x16xf32> -> vector<2x16xf32>
    %c0_9 = arith.constant 0 : index
    %c0_10 = arith.constant 0 : index
    %10 = vector.load %arg5[%c0_9, %c0_10] : memref<1x16xf32, #tpu.memory_space<vmem>>, vector<1x16xf32>
    %11 = vector.broadcast %10 : vector<1x16xf32> to vector<2x16xf32>
    %12 = arith.addf %9, %11 : vector<2x16xf32>
    %cst_11 = arith.constant 0.000000e+00 : f32
    %13 = vector.broadcast %cst_11 : f32 to vector<2x16xf32>
    %14 = arith.maximumf %12, %13 : vector<2x16xf32>
    %c0_12 = arith.constant 0 : index
    %c0_13 = arith.constant 0 : index
    %15 = vector.load %arg6[%c0_12, %c0_13] : memref<16x10xf32, #tpu.memory_space<vmem>>, vector<16x10xf32>
    %cst_14 = arith.constant dense<0.000000e+00> : vector<2x10xf32>
    %16 = tpu.matmul %14, %15, %cst_14 {dimension_numbers = #tpu.dot_dimension_numbers<[1], [0], [0], [1], [0, 0, 1, 1], [], []>} : vector<2x16xf32>, vector<16x10xf32>, vector<2x10xf32> -> vector<2x10xf32>
    %c0_15 = arith.constant 0 : index
    %c0_16 = arith.constant 0 : index
    %17 = vector.load %arg7[%c0_15, %c0_16] : memref<1x10xf32, #tpu.memory_space<vmem>>, vector<1x10xf32>
    %18 = vector.broadcast %17 : vector<1x10xf32> to vector<2x10xf32>
    %19 = arith.addf %16, %18 : vector<2x10xf32>
    %c0_17 = arith.constant 0 : index
    %c0_18 = arith.constant 0 : index
    %20 = vector.load %arg8[%c0_17, %c0_18] : memref<2x10xf32, #tpu.memory_space<vmem>>, vector<2x10xf32>
    tpu.vector_store %arg8[%c0_17, %c0_18], %19 {strides = array<i32>} : memref<2x10xf32, #tpu.memory_space<vmem>>, vector<2x10xf32>,
    return
  }
  func.func @transform_0(%arg0: i32) -> (i32, i32) {
    %c0_i32 = arith.constant 0 : i32
    %c0_i32_0 = arith.constant 0 : i32
    return %arg0, %c0_i32 : i32, i32
  }
  func.func @transform_1(%arg0: i32) -> (i32, i32) {
    %c0_i32 = arith.constant 0 : i32
    %c0_i32_0 = arith.constant 0 : i32
    %c0_i32_1 = arith.constant 0 : i32
    return %c0_i32, %c0_i32_0 : i32, i32
  }
  func.func @transform_2(%arg0: i32) -> (i32, i32) {
    %c0_i32 = arith.constant 0 : i32
    %c0_i32_0 = arith.constant 0 : i32
    %c0_i32_1 = arith.constant 0 : i32
    return %c0_i32, %c0_i32_0 : i32, i32
  }
  func.func @transform_3(%arg0: i32) -> (i32, i32) {
    %c0_i32 = arith.constant 0 : i32
    %c0_i32_0 = arith.constant 0 : i32
    %c0_i32_1 = arith.constant 0 : i32
    return %c0_i32, %c0_i32_0 : i32, i32
  }
  func.func @transform_4(%arg0: i32) -> (i32, i32) {
    %c0_i32 = arith.constant 0 : i32
    %c0_i32_0 = arith.constant 0 : i32
    %c0_i32_1 = arith.constant 0 : i32
    return %c0_i32, %c0_i32_0 : i32, i32
  }
  func.func @transform_5(%arg0: i32) -> (i32, i32) {
    %c0_i32 = arith.constant 0 : i32
    %c0_i32_0 = arith.constant 0 : i32
    %c0_i32_1 = arith.constant 0 : i32
    return %c0_i32, %c0_i32_0 : i32, i32
  }
  func.func @transform_6(%arg0: i32) -> (i32, i32) {
    %c0_i32 = arith.constant 0 : i32
    %c0_i32_0 = arith.constant 0 : i32
    %c0_i32_1 = arith.constant 0 : i32
    return %c0_i32, %c0_i32_0 : i32, i32
  }
  func.func @transform_7(%arg0: i32) -> (i32, i32) {
    %c0_i32 = arith.constant 0 : i32
    %c0_i32_0 = arith.constant 0 : i32
    return %arg0, %c0_i32 : i32, i32
  }
}

</mosaic_0001>

<llo_original>
// kernel: seqconvnet_forward.3
$region0: #{seqconvnet_forward.3}
  #allocation0 [shape = 'u32[]', space=smem, size = 0x4, offset = 0x4, fixed_abs, tag = 'smem constant byte address 0x4 - core index']
  #allocation1 [shape = 'u32[72,128]{1,0:T(1,128)}', space=vmem, size = 0x9000, scoped, tag = 'internal scratch']
  %s0 = inlined_call_operand.vmem [shape: f32[8,75], index: 0, kind: input, shape index: {}]
  %s1 = inlined_call_operand.vmem [shape: f32[8,1], index: 1, kind: input, shape index: {}]
  %s2 = inlined_call_operand.vmem [shape: f32[75,392], index: 2, kind: input, shape index: {}]
  %s3 = inlined_call_operand.vmem [shape: f32[75,392], index: 3, kind: input, shape index: {}]
  %s4 = inlined_call_operand.vmem [shape: f32[75,392], index: 4, kind: input, shape index: {}]
  %s5 = inlined_call_operand.vmem [shape: f32[75,392], index: 5, kind: input, shape index: {}]
  %s6 = inlined_call_operand.vmem [shape: f32[8,392], index: 6, kind: output, shape index: {}]
  %s7 = sld [smem:[#allocation0]]
  $region34: #{seqconvnet_forward.3} parent=0
    _
  %s9 = ssub.s32 1, %s7
  %s10 = scalar_select 0, %s9, %s7
  // Predicated region
  $region2: #{seqconvnet_forward.3} parent=0 // pred_check
    _
  $region3: #{seqconvnet_forward.3} parent=0 // pred_check_branch
    %12 = sbr.rel (0) target = $region5
  $region4: #{seqconvnet_forward.3} parent=0 // pred_region
    _
  $region5: #{seqconvnet_forward.3} parent=0 // pred_fallthru
    _
  // Predicated region
  $region6: #{seqconvnet_forward.3} parent=0 // pred_check
    _
  $region7: #{seqconvnet_forward.3} parent=0 // pred_check_branch
    %14 = sbr.rel (0) target = $region9
  $region8: #{seqconvnet_forward.3} parent=0 // pred_region
    _
  $region9: #{seqconvnet_forward.3} parent=0 // pred_fallthru
    _
  // Predicated region
  $region10: #{seqconvnet_forward.3} parent=0 // pred_check
    _
  $region11: #{seqconvnet_forward.3} parent=0 // pred_check_branch
    %16 = sbr.rel (0) target = $region13
  $region12: #{seqconvnet_forward.3} parent=0 // pred_region
    _
  $region13: #{seqconvnet_forward.3} parent=0 // pred_fallthru
    _
  // Predicated region
  $region14: #{seqconvnet_forward.3} parent=0 // pred_check
    _
  $region15: #{seqconvnet_forward.3} parent=0 // pred_check_branch
    %18 = sbr.rel (0) target = $region17
  $region16: #{seqconvnet_forward.3} parent=0 // pred_region
    _
  $region17: #{seqconvnet_forward.3} parent=0 // pred_fallthru
    _
  // Predicated region
  $region18: #{seqconvnet_forward.3} parent=0 // pred_check
    _
  $region19: #{seqconvnet_forward.3} parent=0 // pred_check_branch
    %20 = sbr.rel (0) target = $region21
  $region20: #{seqconvnet_forward.3} parent=0 // pred_region
    _
  $region21: #{seqconvnet_forward.3} parent=0 // pred_fallthru
    _
  // Predicated region
  $region22: #{seqconvnet_forward.3} parent=0 // pred_check
    _
  $region23: #{seqconvnet_forward.3} parent=0 // pred_check_branch
    %22 = sbr.rel (0) target = $region25
  $region24: #{seqconvnet_forward.3} parent=0 // pred_region
    _
  $region25: #{seqconvnet_forward.3} parent=0 // pred_fallthru
    _
  %v23 = vld [vmem:[%s0] sm:$0xff]
  %v24 = vld [vmem:[%s2] sm:$0xff]
  %v25 = vld [vmem:[%s2 + $0x8] sm:$0xff]
  %v26 = vld [vmem:[%s2 + $0x10] sm:$0xff]
  %v27 = vld [vmem:[%s2 + $0x18] sm:$0xff]
  %v28 = vld [vmem:[%s2 + $0x20] sm:$0xff]
  %v29 = vld [vmem:[%s2 + $0x28] sm:$0xff]
  %v30 = vld [vmem:[%s2 + $0x30] sm:$0xff]
  %v31 = vld [vmem:[%s2 + $0x38] sm:$0xff]
  %v32 = vld [vmem:[%s2 + $0x40] sm:$0xff]
  %v33 = vld [vmem:[%s2 + $0x48] sm:$0xff]
  %v34 = vld [vmem:[%s2 + $0x50] sm:$0xff]
  %v35 = vld [vmem:[%s2 + $0x58] sm:$0xff]
  %v36 = vld [vmem:[%s2 + $0x60] sm:$0xff]
  %v37 = vld [vmem:[%s2 + $0x68] sm:$0xff]
  %v38 = vld [vmem:[%s2 + $0x70] sm:$0xff]
  %v39 = vld [vmem:[%s2 + $0x78] sm:$0xff]
  %v40 = vld [vmem:[%s2 + $0x80] sm:$0xff]
  %v41 = vld [vmem:[%s2 + $0x88] sm:$0xff]
  %v42 = vld [vmem:[%s2 + $0x90] sm:$0xff]
  %v43 = vld [vmem:[%s2 + $0x98] sm:$0xff]
  %v44 = vld [vmem:[%s2 + $0xa0] sm:$0xff]
  %v45 = vld [vmem:[%s2 + $0xa8] sm:$0xff]
  %v46 = vld [vmem:[%s2 + $0xb0] sm:$0xff]
  %v47 = vld [vmem:[%s2 + $0xb8] sm:$0xff]
  %v48 = vld [vmem:[%s2 + $0xc0] sm:$0xff]
  %v49 = vld [vmem:[%s2 + $0xc8] sm:$0xff]
  %v50 = vld [vmem:[%s2 + $0xd0] sm:$0xff]
  %v51 = vld [vmem:[%s2 + $0xd8] sm:$0xff]
  %v52 = vld [vmem:[%s2 + $0xe0] sm:$0xff]
  %v53 = vld [vmem:[%s2 + $0xe8] sm:$0xff]
  %v54 = vld [vmem:[%s2 + $0xf0] sm:$0xff]
  %v55 = vld [vmem:[%s2 + $0xf8] sm:$0xff]
  %v56 = vld [vmem:[%s2 + $0x100] sm:$0xff]
  %v57 = vld [vmem:[%s2 + $0x108] sm:$0xff]
  %v58 = vld [vmem:[%s2 + $0x110] sm:$0xff]
  %v59 = vld [vmem:[%s2 + $0x118] sm:$0xff]
  %v60 = vld [vmem:[%s2 + $0x120] sm:$0x7]
  %v61 = vld [vmem:[%s2 + $0x128] sm:$0x7]
  %v62 = vld [vmem:[%s2 + $0x130] sm:$0x7]
  %v63 = vld [vmem:[%s2 + $0x138] sm:$0x7]
  %vm64 = vcmask 613376
  %v66 = vsel %vm64, %v23, 0
  %vm68 = vcmask 1042432
  %v70 = vsel %vm68, %v60, 0
  %v73 = vsel %vm68, %v61, 0
  %v76 = vsel %vm68, %v62, 0
  %v79 = vsel %vm68, %v63, 0
  %81 = vmatpush.msra.mxu0 0.0
  %82 = vmatpush.msra.mxu0 0.0
  %83 = vmatpush.msra.mxu0 0.0
  %84 = vmatpush.msra.mxu0 0.0
  %85 = vmatpush.msra.mxu0 0.0
  %86 = vmatpush.msra.mxu0 0.0
  %87 = vmatpush.msra.mxu0 %v70
  %88 = vmatpush.msra.mxu0 %v56
  %89 = vmatpush.msra.mxu0 %v52
  %90 = vmatpush.msra.mxu0 %v48
  %91 = vmatpush.msra.mxu0 %v44
  %92 = vmatpush.msra.mxu0 %v40
  %93 = vmatpush.msra.mxu0 %v36
  %94 = vmatpush.msra.mxu0 %v32
  %95 = vmatpush.msra.mxu0 %v28
  %96 = vmatpush.msra.mxu0 %v24
  %97 = vmatmul.f32.gmra.mxu0 %v66
  %v98 = vpop.f32.mrf.mxu0
  %v99 = vadd.f32 0.0, %v98
  %100 = vdwg.mxu0
  %101 = vmatpush.msra.mxu0 0.0
  %102 = vmatpush.msra.mxu0 0.0
  %103 = vmatpush.msra.mxu0 0.0
  %104 = vmatpush.msra.mxu0 0.0
  %105 = vmatpush.msra.mxu0 0.0
  %106 = vmatpush.msra.mxu0 0.0
  %107 = vmatpush.msra.mxu0 %v73
  %108 = vmatpush.msra.mxu0 %v57
  %109 = vmatpush.msra.mxu0 %v53
  %110 = vmatpush.msra.mxu0 %v49
  %111 = vmatpush.msra.mxu0 %v45
  %112 = vmatpush.msra.mxu0 %v41
  %113 = vmatpush.msra.mxu0 %v37
  %114 = vmatpush.msra.mxu0 %v33
  %115 = vmatpush.msra.mxu0 %v29
  %116 = vmatpush.msra.mxu0 %v25
  %117 = vmatmul.f32.gmra.mxu0 %v66
  %v118 = vpop.f32.mrf.mxu0
  %v119 = vadd.f32 0.0, %v118
  %120 = vdwg.mxu0
  %121 = vmatpush.msra.mxu0 0.0
  %122 = vmatpush.msra.mxu0 0.0
  %123 = vmatpush.msra.mxu0 0.0
  %124 = vmatpush.msra.mxu0 0.0
  %125 = vmatpush.msra.mxu0 0.0
  %126 = vmatpush.msra.mxu0 0.0
  %127 = vmatpush.msra.mxu0 %v76
  %128 = vmatpush.msra.mxu0 %v58
  %129 = vmatpush.msra.mxu0 %v54
  %130 = vmatpush.msra.mxu0 %v50
  %131 = vmatpush.msra.mxu0 %v46
  %132 = vmatpush.msra.mxu0 %v42
  %133 = vmatpush.msra.mxu0 %v38
  %134 = vmatpush.msra.mxu0 %v34
  %135 = vmatpush.msra.mxu0 %v30
  %136 = vmatpush.msra.mxu0 %v26
  %137 = vmatmul.f32.gmra.mxu0 %v66
  %v138 = vpop.f32.mrf.mxu0
  %v139 = vadd.f32 0.0, %v138
  %140 = vdwg.mxu0
  %141 = vmatpush.msra.mxu0 0.0
  %142 = vmatpush.msra.mxu0 0.0
  %143 = vmatpush.msra.mxu0 0.0
  %144 = vmatpush.msra.mxu0 0.0
  %145 = vmatpush.msra.mxu0 0.0
  %146 = vmatpush.msra.mxu0 0.0
  %147 = vmatpush.msra.mxu0 %v79
  %148 = vmatpush.msra.mxu0 %v59
  %149 = vmatpush.msra.mxu0 %v55
  %150 = vmatpush.msra.mxu0 %v51
  %151 = vmatpush.msra.mxu0 %v47
  %152 = vmatpush.msra.mxu0 %v43
  %153 = vmatpush.msra.mxu0 %v39
  %154 = vmatpush.msra.mxu0 %v35
  %155 = vmatpush.msra.mxu0 %v31
  %156 = vmatpush.msra.mxu0 %v27
  %157 = vmatmul.f32.gmra.mxu0 %v66
  %v158 = vpop.f32.mrf.mxu0
  %v159 = vadd.f32 0.0, %v158
  %160 = vdwg.mxu0
  %v161 = vld [vmem:[%s3] sm:$0xff]
  %v162 = vld [vmem:[%s3 + $0x8] sm:$0xff]
  %v163 = vld [vmem:[%s3 + $0x10] sm:$0xff]
  %v164 = vld [vmem:[%s3 + $0x18] sm:$0xff]
  %v165 = vld [vmem:[%s3 + $0x20] sm:$0xff]
  %v166 = vld [vmem:[%s3 + $0x28] sm:$0xff]
  %v167 = vld [vmem:[%s3 + $0x30] sm:$0xff]
  %v168 = vld [vmem:[%s3 + $0x38] sm:$0xff]
  %v169 = vld [vmem:[%s3 + $0x40] sm:$0xff]
  %v170 = vld [vmem:[%s3 + $0x48] sm:$0xff]
  %v171 = vld [vmem:[%s3 + $0x50] sm:$0xff]
  %v172 = vld [vmem:[%s3 + $0x58] sm:$0xff]
  %v173 = vld [vmem:[%s3 + $0x60] sm:$0xff]
  %v174 = vld [vmem:[%s3 + $0x68] sm:$0xff]
  %v175 = vld [vmem:[%s3 + $0x70] sm:$0xff]
  %v176 = vld [vmem:[%s3 + $0x78] sm:$0xff]
  %v177 = vld [vmem:[%s3 + $0x80] sm:$0xff]
  %v178 = vld [vmem:[%s3 + $0x88] sm:$0xff]
  %v179 = vld [vmem:[%s3 + $0x90] sm:$0xff]
  %v180 = vld [vmem:[%s3 + $0x98] sm:$0xff]
  %v181 = vld [vmem:[%s3 + $0xa0] sm:$0xff]
  %v182 = vld [vmem:[%s3 + $0xa8] sm:$0xff]
  %v183 = vld [vmem:[%s3 + $0xb0] sm:$0xff]
  %v184 = vld [vmem:[%s3 + $0xb8] sm:$0xff]
  %v185 = vld [vmem:[%s3 + $0xc0] sm:$0xff]
  %v186 = vld [vmem:[%s3 + $0xc8] sm:$0xff]
  %v187 = vld [vmem:[%s3 + $0xd0] sm:$0xff]
  %v188 = vld [vmem:[%s3 + $0xd8] sm:$0xff]
  %v189 = vld [vmem:[%s3 + $0xe0] sm:$0xff]
  %v190 = vld [vmem:[%s3 + $0xe8] sm:$0xff]
  %v191 = vld [vmem:[%s3 + $0xf0] sm:$0xff]
  %v192 = vld [vmem:[%s3 + $0xf8] sm:$0xff]
  %v193 = vld [vmem:[%s3 + $0x100] sm:$0xff]
  %v194 = vld [vmem:[%s3 + $0x108] sm:$0xff]
  %v195 = vld [vmem:[%s3 + $0x110] sm:$0xff]
  %v196 = vld [vmem:[%s3 + $0x118] sm:$0xff]
  %v197 = vld [vmem:[%s3 + $0x120] sm:$0x7]
  %v198 = vld [vmem:[%s3 + $0x128] sm:$0x7]
  %v199 = vld [vmem:[%s3 + $0x130] sm:$0x7]
  %v200 = vld [vmem:[%s3 + $0x138] sm:$0x7]
  %v202 = vsel %vm68, %v197, 0
  %v205 = vsel %vm68, %v198, 0
  %v208 = vsel %vm68, %v199, 0
  %v211 = vsel %vm68, %v200, 0
  %213 = vmatpush.msra.mxu0 0.0
  %214 = vmatpush.msra.mxu0 0.0
  %215 = vmatpush.msra.mxu0 0.0
  %216 = vmatpush.msra.mxu0 0.0
  %217 = vmatpush.msra.mxu0 0.0
  %218 = vmatpush.msra.mxu0 0.0
  %219 = vmatpush.msra.mxu0 %v202
  %220 = vmatpush.msra.mxu0 %v193
  %221 = vmatpush.msra.mxu0 %v189
  %222 = vmatpush.msra.mxu0 %v185
  %223 = vmatpush.msra.mxu0 %v181
  %224 = vmatpush.msra.mxu0 %v177
  %225 = vmatpush.msra.mxu0 %v173
  %226 = vmatpush.msra.mxu0 %v169
  %227 = vmatpush.msra.mxu0 %v165
  %228 = vmatpush.msra.mxu0 %v161
  %229 = vmatmul.f32.gmra.mxu0 %v66
  %v230 = vpop.f32.mrf.mxu0
  %v231 = vadd.f32 0.0, %v230
  %232 = vdwg.mxu0
  %233 = vmatpush.msra.mxu0 0.0
  %234 = vmatpush.msra.mxu0 0.0
  %235 = vmatpush.msra.mxu0 0.0
  %236 = vmatpush.msra.mxu0 0.0
  %237 = vmatpush.msra.mxu0 0.0
  %238 = vmatpush.msra.mxu0 0.0
  %239 = vmatpush.msra.mxu0 %v205
  %240 = vmatpush.msra.mxu0 %v194
  %241 = vmatpush.msra.mxu0 %v190
  %242 = vmatpush.msra.mxu0 %v186
  %243 = vmatpush.msra.mxu0 %v182
  %244 = vmatpush.msra.mxu0 %v178
  %245 = vmatpush.msra.mxu0 %v174
  %246 = vmatpush.msra.mxu0 %v170
  %247 = vmatpush.msra.mxu0 %v166
  %248 = vmatpush.msra.mxu0 %v162
  %249 = vmatmul.f32.gmra.mxu0 %v66
  %v250 = vpop.f32.mrf.mxu0
  %v251 = vadd.f32 0.0, %v250
  %252 = vdwg.mxu0
  %253 = vmatpush.msra.mxu0 0.0
  %254 = vmatpush.msra.mxu0 0.0
  %255 = vmatpush.msra.mxu0 0.0
  %256 = vmatpush.msra.mxu0 0.0
  %257 = vmatpush.msra.mxu0 0.0
  %258 = vmatpush.msra.mxu0 0.0
  %259 = vmatpush.msra.mxu0 %v208
  %260 = vmatpush.msra.mxu0 %v195
  %261 = vmatpush.msra.mxu0 %v191
  %262 = vmatpush.msra.mxu0 %v187
  %263 = vmatpush.msra.mxu0 %v183
  %264 = vmatpush.msra.mxu0 %v179
  %265 = vmatpush.msra.mxu0 %v175
  %266 = vmatpush.msra.mxu0 %v171
  %267 = vmatpush.msra.mxu0 %v167
  %268 = vmatpush.msra.mxu0 %v163
  %269 = vmatmul.f32.gmra.mxu0 %v66
  %v270 = vpop.f32.mrf.mxu0
  %v271 = vadd.f32 0.0, %v270
  %272 = vdwg.mxu0
  %273 = vmatpush.msra.mxu0 0.0
  %274 = vmatpush.msra.mxu0 0.0
  %275 = vmatpush.msra.mxu0 0.0
  %276 = vmatpush.msra.mxu0 0.0
  %277 = vmatpush.msra.mxu0 0.0
  %278 = vmatpush.msra.mxu0 0.0
  %279 = vmatpush.msra.mxu0 %v211
  %280 = vmatpush.msra.mxu0 %v196
  %281 = vmatpush.msra.mxu0 %v192
  %282 = vmatpush.msra.mxu0 %v188
  %283 = vmatpush.msra.mxu0 %v184
  %284 = vmatpush.msra.mxu0 %v180
  %285 = vmatpush.msra.mxu0 %v176
  %286 = vmatpush.msra.mxu0 %v172
  %287 = vmatpush.msra.mxu0 %v168
  %288 = vmatpush.msra.mxu0 %v164
  %289 = vmatmul.f32.gmra.mxu0 %v66
  %v290 = vpop.f32.mrf.mxu0
  %v291 = vadd.f32 0.0, %v290
  %292 = vdwg.mxu0
  %v293 = vmax.f32 %v99, %v231
  %v294 = vmax.f32 %v119, %v251
  %v295 = vmax.f32 %v139, %v271
  %v296 = vmax.f32 %v159, %v291
  %v297 = vld [vmem:[%s4] sm:$0xff]
  %v298 = vld [vmem:[%s4 + $0x8] sm:$0xff]
  %v299 = vld [vmem:[%s4 + $0x10] sm:$0xff]
  %v300 = vld [vmem:[%s4 + $0x18] sm:$0xff]
  %v301 = vld [vmem:[%s4 + $0x20] sm:$0xff]
  %v302 = vld [vmem:[%s4 + $0x28] sm:$0xff]
  %v303 = vld [vmem:[%s4 + $0x30] sm:$0xff]
  %v304 = vld [vmem:[%s4 + $0x38] sm:$0xff]
  %v305 = vld [vmem:[%s4 + $0x40] sm:$0xff]
  %v306 = vld [vmem:[%s4 + $0x48] sm:$0xff]
  %v307 = vld [vmem:[%s4 + $0x50] sm:$0xff]
  %v308 = vld [vmem:[%s4 + $0x58] sm:$0xff]
  %v309 = vld [vmem:[%s4 + $0x60] sm:$0xff]
  %v310 = vld [vmem:[%s4 + $0x68] sm:$0xff]
  %v311 = vld [vmem:[%s4 + $0x70] sm:$0xff]
  %v312 = vld [vmem:[%s4 + $0x78] sm:$0xff]
  %v313 = vld [vmem:[%s4 + $0x80] sm:$0xff]
  %v314 = vld [vmem:[%s4 + $0x88] sm:$0xff]
  %v315 = vld [vmem:[%s4 + $0x90] sm:$0xff]
  %v316 = vld [vmem:[%s4 + $0x98] sm:$0xff]
  %v317 = vld [vmem:[%s4 + $0xa0] sm:$0xff]
  %v318 = vld [vmem:[%s4 + $0xa8] sm:$0xff]
  %v319 = vld [vmem:[%s4 + $0xb0] sm:$0xff]
  %v320 = vld [vmem:[%s4 + $0xb8] sm:$0xff]
  %v321 = vld [vmem:[%s4 + $0xc0] sm:$0xff]
  %v322 = vld [vmem:[%s4 + $0xc8] sm:$0xff]
  %v323 = vld [vmem:[%s4 + $0xd0] sm:$0xff]
  %v324 = vld [vmem:[%s4 + $0xd8] sm:$0xff]
  %v325 = vld [vmem:[%s4 + $0xe0] sm:$0xff]
  %v326 = vld [vmem:[%s4 + $0xe8] sm:$0xff]
  %v327 = vld [vmem:[%s4 + $0xf0] sm:$0xff]
  %v328 = vld [vmem:[%s4 + $0xf8] sm:$0xff]
  %v329 = vld [vmem:[%s4 + $0x100] sm:$0xff]
  %v330 = vld [vmem:[%s4 + $0x108] sm:$0xff]
  %v331 = vld [vmem:[%s4 + $0x110] sm:$0xff]
  %v332 = vld [vmem:[%s4 + $0x118] sm:$0xff]
  %v333 = vld [vmem:[%s4 + $0x120] sm:$0x7]
  %v334 = vld [vmem:[%s4 + $0x128] sm:$0x7]
  %v335 = vld [vmem:[%s4 + $0x130] sm:$0x7]
  %v336 = vld [vmem:[%s4 + $0x138] sm:$0x7]
  %v338 = vsel %vm68, %v333, 0
  %v341 = vsel %vm68, %v334, 0
  %v344 = vsel %vm68, %v335, 0
  %v347 = vsel %vm68, %v336, 0
  %349 = vmatpush.msra.mxu0 0.0
  %350 = vmatpush.msra.mxu0 0.0
  %351 = vmatpush.msra.mxu0 0.0
  %352 = vmatpush.msra.mxu0 0.0
  %353 = vmatpush.msra.mxu0 0.0
  %354 = vmatpush.msra.mxu0 0.0
  %355 = vmatpush.msra.mxu0 %v338
  %356 = vmatpush.msra.mxu0 %v329
  %357 = vmatpush.msra.mxu0 %v325
  %358 = vmatpush.msra.mxu0 %v321
  %359 = vmatpush.msra.mxu0 %v317
  %360 = vmatpush.msra.mxu0 %v313
  %361 = vmatpush.msra.mxu0 %v309
  %362 = vmatpush.msra.mxu0 %v305
  %363 = vmatpush.msra.mxu0 %v301
  %364 = vmatpush.msra.mxu0 %v297
  %365 = vmatmul.f32.gmra.mxu0 %v66
  %v366 = vpop.f32.mrf.mxu0
  %v367 = vadd.f32 0.0, %v366
  %368 = vdwg.mxu0
  %369 = vmatpush.msra.mxu0 0.0
  %370 = vmatpush.msra.mxu0 0.0
  %371 = vmatpush.msra.mxu0 0.0
  %372 = vmatpush.msra.mxu0 0.0
  %373 = vmatpush.msra.mxu0 0.0
  %374 = vmatpush.msra.mxu0 0.0
  %375 = vmatpush.msra.mxu0 %v341
  %376 = vmatpush.msra.mxu0 %v330
  %377 = vmatpush.msra.mxu0 %v326
  %378 = vmatpush.msra.mxu0 %v322
  %379 = vmatpush.msra.mxu0 %v318
  %380 = vmatpush.msra.mxu0 %v314
  %381 = vmatpush.msra.mxu0 %v310
  %382 = vmatpush.msra.mxu0 %v306
  %383 = vmatpush.msra.mxu0 %v302
  %384 = vmatpush.msra.mxu0 %v298
  %385 = vmatmul.f32.gmra.mxu0 %v66
  %v386 = vpop.f32.mrf.mxu0
  %v387 = vadd.f32 0.0, %v386
  %388 = vdwg.mxu0
  %389 = vmatpush.msra.mxu0 0.0
  %390 = vmatpush.msra.mxu0 0.0
  %391 = vmatpush.msra.mxu0 0.0
  %392 = vmatpush.msra.mxu0 0.0
  %393 = vmatpush.msra.mxu0 0.0
  %394 = vmatpush.msra.mxu0 0.0
  %395 = vmatpush.msra.mxu0 %v344
  %396 = vmatpush.msra.mxu0 %v331
  %397 = vmatpush.msra.mxu0 %v327
  %398 = vmatpush.msra.mxu0 %v323
  %399 = vmatpush.msra.mxu0 %v319
  %400 = vmatpush.msra.mxu0 %v315
  %401 = vmatpush.msra.mxu0 %v311
  %402 = vmatpush.msra.mxu0 %v307
  %403 = vmatpush.msra.mxu0 %v303
  %404 = vmatpush.msra.mxu0 %v299
  %405 = vmatmul.f32.gmra.mxu0 %v66
  %v406 = vpop.f32.mrf.mxu0
  %v407 = vadd.f32 0.0, %v406
  %408 = vdwg.mxu0
  %409 = vmatpush.msra.mxu0 0.0
  %410 = vmatpush.msra.mxu0 0.0
  %411 = vmatpush.msra.mxu0 0.0
  %412 = vmatpush.msra.mxu0 0.0
  %413 = vmatpush.msra.mxu0 0.0
  %414 = vmatpush.msra.mxu0 0.0
  %415 = vmatpush.msra.mxu0 %v347
  %416 = vmatpush.msra.mxu0 %v332
  %417 = vmatpush.msra.mxu0 %v328
  %418 = vmatpush.msra.mxu0 %v324
  %419 = vmatpush.msra.mxu0 %v320
  %420 = vmatpush.msra.mxu0 %v316
  %421 = vmatpush.msra.mxu0 %v312
  %422 = vmatpush.msra.mxu0 %v308
  %423 = vmatpush.msra.mxu0 %v304
  %424 = vmatpush.msra.mxu0 %v300
  %425 = vmatmul.f32.gmra.mxu0 %v66
  %v426 = vpop.f32.mrf.mxu0
  %v427 = vadd.f32 0.0, %v426
  %428 = vdwg.mxu0
  %v429 = vld [vmem:[%s5] sm:$0xff]
  %v430 = vld [vmem:[%s5 + $0x8] sm:$0xff]
  %v431 = vld [vmem:[%s5 + $0x10] sm:$0xff]
  %v432 = vld [vmem:[%s5 + $0x18] sm:$0xff]
  %v433 = vld [vmem:[%s5 + $0x20] sm:$0xff]
  %v434 = vld [vmem:[%s5 + $0x28] sm:$0xff]
  %v435 = vld [vmem:[%s5 + $0x30] sm:$0xff]
  %v436 = vld [vmem:[%s5 + $0x38] sm:$0xff]
  %v437 = vld [vmem:[%s5 + $0x40] sm:$0xff]
  %v438 = vld [vmem:[%s5 + $0x48] sm:$0xff]
  %v439 = vld [vmem:[%s5 + $0x50] sm:$0xff]
  %v440 = vld [vmem:[%s5 + $0x58] sm:$0xff]
  %v441 = vld [vmem:[%s5 + $0x60] sm:$0xff]
  %v442 = vld [vmem:[%s5 + $0x68] sm:$0xff]
  %v443 = vld [vmem:[%s5 + $0x70] sm:$0xff]
  %v444 = vld [vmem:[%s5 + $0x78] sm:$0xff]
  %v445 = vld [vmem:[%s5 + $0x80] sm:$0xff]
  %v446 = vld [vmem:[%s5 + $0x88] sm:$0xff]
  %v447 = vld [vmem:[%s5 + $0x90] sm:$0xff]
  %v448 = vld [vmem:[%s5 + $0x98] sm:$0xff]
  %v449 = vld [vmem:[%s5 + $0xa0] sm:$0xff]
  %v450 = vld [vmem:[%s5 + $0xa8] sm:$0xff]
  %v451 = vld [vmem:[%s5 + $0xb0] sm:$0xff]
  %v452 = vld [vmem:[%s5 + $0xb8] sm:$0xff]
  %v453 = vld [vmem:[%s5 + $0xc0] sm:$0xff]
  %v454 = vld [vmem:[%s5 + $0xc8] sm:$0xff]
  %v455 = vld [vmem:[%s5 + $0xd0] sm:$0xff]
  %v456 = vld [vmem:[%s5 + $0xd8] sm:$0xff]
  %v457 = vld [vmem:[%s5 + $0xe0] sm:$0xff]
  %v458 = vld [vmem:[%s5 + $0xe8] sm:$0xff]
  %v459 = vld [vmem:[%s5 + $0xf0] sm:$0xff]
  %v460 = vld [vmem:[%s5 + $0xf8] sm:$0xff]
  %v461 = vld [vmem:[%s5 + $0x100] sm:$0xff]
  %v462 = vld [vmem:[%s5 + $0x108] sm:$0xff]
  %v463 = vld [vmem:[%s5 + $0x110] sm:$0xff]
  %v464 = vld [vmem:[%s5 + $0x118] sm:$0xff]
  %v465 = vld [vmem:[%s5 + $0x120] sm:$0x7]
  %v466 = vld [vmem:[%s5 + $0x128] sm:$0x7]
  %v467 = vld [vmem:[%s5 + $0x130] sm:$0x7]
  %v468 = vld [vmem:[%s5 + $0x138] sm:$0x7]
  %v470 = vsel %vm68, %v465, 0
  %v473 = vsel %vm68, %v466, 0
  %v476 = vsel %vm68, %v467, 0
  %v479 = vsel %vm68, %v468, 0
  %481 = vmatpush.msra.mxu0 0.0
  %482 = vmatpush.msra.mxu0 0.0
  %483 = vmatpush.msra.mxu0 0.0
  %484 = vmatpush.msra.mxu0 0.0
  %485 = vmatpush.msra.mxu0 0.0
  %486 = vmatpush.msra.mxu0 0.0
  %487 = vmatpush.msra.mxu0 %v470
  %488 = vmatpush.msra.mxu0 %v461
  %489 = vmatpush.msra.mxu0 %v457
  %490 = vmatpush.msra.mxu0 %v453
  %491 = vmatpush.msra.mxu0 %v449
  %492 = vmatpush.msra.mxu0 %v445
  %493 = vmatpush.msra.mxu0 %v441
  %494 = vmatpush.msra.mxu0 %v437
  %495 = vmatpush.msra.mxu0 %v433
  %496 = vmatpush.msra.mxu0 %v429
  %497 = vmatmul.f32.gmra.mxu0 %v66
  %v498 = vpop.f32.mrf.mxu0
  %v499 = vadd.f32 0.0, %v498
  %500 = vdwg.mxu0
  %501 = vmatpush.msra.mxu0 0.0
  %502 = vmatpush.msra.mxu0 0.0
  %503 = vmatpush.msra.mxu0 0.0
  %504 = vmatpush.msra.mxu0 0.0
  %505 = vmatpush.msra.mxu0 0.0
  %506 = vmatpush.msra.mxu0 0.0
  %507 = vmatpush.msra.mxu0 %v473
  %508 = vmatpush.msra.mxu0 %v462
  %509 = vmatpush.msra.mxu0 %v458
  %510 = vmatpush.msra.mxu0 %v454
  %511 = vmatpush.msra.mxu0 %v450
  %512 = vmatpush.msra.mxu0 %v446
  %513 = vmatpush.msra.mxu0 %v442
  %514 = vmatpush.msra.mxu0 %v438
  %515 = vmatpush.msra.mxu0 %v434
  %516 = vmatpush.msra.mxu0 %v430
  %517 = vmatmul.f32.gmra.mxu0 %v66
  %v518 = vpop.f32.mrf.mxu0
  %v519 = vadd.f32 0.0, %v518
  %520 = vdwg.mxu0
  %521 = vmatpush.msra.mxu0 0.0
  %522 = vmatpush.msra.mxu0 0.0
  %523 = vmatpush.msra.mxu0 0.0
  %524 = vmatpush.msra.mxu0 0.0
  %525 = vmatpush.msra.mxu0 0.0
  %526 = vmatpush.msra.mxu0 0.0
  %527 = vmatpush.msra.mxu0 %v476
  %528 = vmatpush.msra.mxu0 %v463
  %529 = vmatpush.msra.mxu0 %v459
  %530 = vmatpush.msra.mxu0 %v455
  %531 = vmatpush.msra.mxu0 %v451
  %532 = vmatpush.msra.mxu0 %v447
  %533 = vmatpush.msra.mxu0 %v443
  %534 = vmatpush.msra.mxu0 %v439
  %535 = vmatpush.msra.mxu0 %v435
  %536 = vmatpush.msra.mxu0 %v431
  %537 = vmatmul.f32.gmra.mxu0 %v66
  %v538 = vpop.f32.mrf.mxu0
  %v539 = vadd.f32 0.0, %v538
  %540 = vdwg.mxu0
  %541 = vmatpush.msra.mxu0 0.0
  %542 = vmatpush.msra.mxu0 0.0
  %543 = vmatpush.msra.mxu0 0.0
  %544 = vmatpush.msra.mxu0 0.0
  %545 = vmatpush.msra.mxu0 0.0
  %546 = vmatpush.msra.mxu0 0.0
  %547 = vmatpush.msra.mxu0 %v479
  %548 = vmatpush.msra.mxu0 %v464
  %549 = vmatpush.msra.mxu0 %v460
  %550 = vmatpush.msra.mxu0 %v456
  %551 = vmatpush.msra.mxu0 %v452
  %552 = vmatpush.msra.mxu0 %v448
  %553 = vmatpush.msra.mxu0 %v444
  %554 = vmatpush.msra.mxu0 %v440
  %555 = vmatpush.msra.mxu0 %v436
  %556 = vmatpush.msra.mxu0 %v432
  %557 = vmatmul.f32.gmra.mxu0 %v66
  %v558 = vpop.f32.mrf.mxu0
  %v559 = vadd.f32 0.0, %v558
  %560 = vdwg.mxu0
  %v561 = vmax.f32 %v367, %v499
  %v562 = vmax.f32 %v387, %v519
  %v563 = vmax.f32 %v407, %v539
  %v564 = vmax.f32 %v427, %v559
  %v565 = vmax.f32 %v293, %v561
  %v566 = vmax.f32 %v294, %v562
  %v567 = vmax.f32 %v295, %v563
  %v568 = vmax.f32 %v296, %v564
  %v569 = vld [vmem:[%s1] sm:$0xff]
  %571 = vset.pattern.permute.xlu0 0
  %572 = vperm.xlu0 %571, %v569
  %v573 = vpop.permute.xlu0 %572
  %v575 = vadd.f32 %v565, %v573
  %v576 = vadd.f32 %v566, %v573
  %v577 = vadd.f32 %v567, %v573
  %v578 = vadd.f32 %v568, %v573
  %v579 = vmax.f32 %v575, 0.0
  %v580 = vmax.f32 %v576, 0.0
  %v581 = vmax.f32 %v577, 0.0
  %v582 = vmax.f32 %v578, 0.0
  %583 = vst [vmem:[%s6] sm:$0xff] %v579
  %584 = vst [vmem:[%s6 + $0x8] sm:$0xff] %v580
  %585 = vst [vmem:[%s6 + $0x10] sm:$0xff] %v581
  %vm586 = vcmask 64512
  %587 = vst.msk [vmem:[%s6 + $0x18] sm:$0xff] %vm586, %v582
  // Predicated region
  $region26: #{seqconvnet_forward.3} parent=0 // pred_check
    _
  $region27: #{seqconvnet_forward.3} parent=0 // pred_check_branch
    %589 = sbr.rel (0) target = $region29
  $region28: #{seqconvnet_forward.3} parent=0 // pred_region
    _
  $region29: #{seqconvnet_forward.3} parent=0 // pred_fallthru
    _
  // Predicated region
  $region30: #{seqconvnet_forward.3} parent=0 // pred_check
    _
  $region31: #{seqconvnet_forward.3} parent=0 // pred_check_branch
    %591 = sbr.rel (0) target = $region33
  $region32: #{seqconvnet_forward.3} parent=0 // pred_region
    _
  $region33: #{seqconvnet_forward.3} parent=0 // pred_fallthru
    _

// kernel: seqconvnet_forward.4
$region0: #{seqconvnet_forward.4}
  #allocation0 [shape = 'u32[]', space=smem, size = 0x4, offset = 0x4, fixed_abs, tag = 'smem constant byte address 0x4 - core index']
  #allocation1 [shape = 'u32[72,128]{1,0:T(1,128)}', space=vmem, size = 0x9000, scoped, tag = 'internal scratch']
  %s0 = inlined_call_operand.vmem [shape: f32[200,8], index: 0, kind: input, shape index: {}]
  %s1 = inlined_call_operand.vmem [shape: f32[1,8], index: 1, kind: input, shape index: {}]
  %s2 = inlined_call_operand.vmem [shape: f32[50,200], index: 2, kind: input, shape index: {}]
  %s3 = inlined_call_operand.vmem [shape: f32[50,200], index: 3, kind: input, shape index: {}]
  %s4 = inlined_call_operand.vmem [shape: f32[50,200], index: 4, kind: input, shape index: {}]
  %s5 = inlined_call_operand.vmem [shape: f32[50,200], index: 5, kind: input, shape index: {}]
  %s6 = inlined_call_operand.vmem [shape: f32[50,8], index: 6, kind: output, shape index: {}]
  %s7 = sld [smem:[#allocation0]]
  $region34: #{seqconvnet_forward.4} parent=0
    _
  %s9 = ssub.s32 1, %s7
  %s10 = scalar_select 0, %s9, %s7
  // Predicated region
  $region2: #{seqconvnet_forward.4} parent=0 // pred_check
    _
  $region3: #{seqconvnet_forward.4} parent=0 // pred_check_branch
    %12 = sbr.rel (0) target = $region5
  $region4: #{seqconvnet_forward.4} parent=0 // pred_region
    _
  $region5: #{seqconvnet_forward.4} parent=0 // pred_fallthru
    _
  // Predicated region
  $region6: #{seqconvnet_forward.4} parent=0 // pred_check
    _
  $region7: #{seqconvnet_forward.4} parent=0 // pred_check_branch
    %14 = sbr.rel (0) target = $region9
  $region8: #{seqconvnet_forward.4} parent=0 // pred_region
    _
  $region9: #{seqconvnet_forward.4} parent=0 // pred_fallthru
    _
  // Predicated region
  $region10: #{seqconvnet_forward.4} parent=0 // pred_check
    _
  $region11: #{seqconvnet_forward.4} parent=0 // pred_check_branch
    %16 = sbr.rel (0) target = $region13
  $region12: #{seqconvnet_forward.4} parent=0 // pred_region
    _
  $region13: #{seqconvnet_forward.4} parent=0 // pred_fallthru
    _
  // Predicated region
  $region14: #{seqconvnet_forward.4} parent=0 // pred_check
    _
  $region15: #{seqconvnet_forward.4} parent=0 // pred_check_branch
    %18 = sbr.rel (0) target = $region17
  $region16: #{seqconvnet_forward.4} parent=0 // pred_region
    _
  $region17: #{seqconvnet_forward.4} parent=0 // pred_fallthru
    _
  // Predicated region
  $region18: #{seqconvnet_forward.4} parent=0 // pred_check
    _
  $region19: #{seqconvnet_forward.4} parent=0 // pred_check_branch
    %20 = sbr.rel (0) target = $region21
  $region20: #{seqconvnet_forward.4} parent=0 // pred_region
    _
  $region21: #{seqconvnet_forward.4} parent=0 // pred_fallthru
    _
  // Predicated region
  $region22: #{seqconvnet_forward.4} parent=0 // pred_check
    _
  $region23: #{seqconvnet_forward.4} parent=0 // pred_check_branch
    %22 = sbr.rel (0) target = $region25
  $region24: #{seqconvnet_forward.4} parent=0 // pred_region
    _
  $region25: #{seqconvnet_forward.4} parent=0 // pred_fallthru
    _
  %v23 = vld [vmem:[%s2] sm:$0xff]
  %v24 = vld [vmem:[%s2 + $0x8] sm:$0xff]
  %v25 = vld [vmem:[%s2 + $0x10] sm:$0xff]
  %v26 = vld [vmem:[%s2 + $0x18] sm:$0xff]
  %v27 = vld [vmem:[%s2 + $0x20] sm:$0xff]
  %v28 = vld [vmem:[%s2 + $0x28] sm:$0xff]
  %v29 = vld [vmem:[%s2 + $0x30] sm:$0xff]
  %v30 = vld [vmem:[%s2 + $0x38] sm:$0xff]
  %v31 = vld [vmem:[%s2 + $0x40] sm:$0xff]
  %v32 = vld [vmem:[%s2 + $0x48] sm:$0xff]
  %v33 = vld [vmem:[%s2 + $0x50] sm:$0xff]
  %v34 = vld [vmem:[%s2 + $0x58] sm:$0xff]
  %v35 = vld [vmem:[%s2 + $0x60] sm:$0x3]
  %v36 = vld [vmem:[%s2 + $0x68] sm:$0x3]
  %v37 = vld [vmem:[%s0] sm:$0xff]
  %v38 = vld [vmem:[%s0 + $0x8] sm:$0xff]
  %v39 = vld [vmem:[%s0 + $0x10] sm:$0xff]
  %v40 = vld [vmem:[%s0 + $0x18] sm:$0xff]
  %v41 = vld [vmem:[%s0 + $0x20] sm:$0xff]
  %v42 = vld [vmem:[%s0 + $0x28] sm:$0xff]
  %v43 = vld [vmem:[%s0 + $0x30] sm:$0xff]
  %v44 = vld [vmem:[%s0 + $0x38] sm:$0xff]
  %v45 = vld [vmem:[%s0 + $0x40] sm:$0xff]
  %v46 = vld [vmem:[%s0 + $0x48] sm:$0xff]
  %v47 = vld [vmem:[%s0 + $0x50] sm:$0xff]
  %v48 = vld [vmem:[%s0 + $0x58] sm:$0xff]
  %v49 = vld [vmem:[%s0 + $0x60] sm:$0xff]
  %v50 = vld [vmem:[%s0 + $0x68] sm:$0xff]
  %v51 = vld [vmem:[%s0 + $0x70] sm:$0xff]
  %v52 = vld [vmem:[%s0 + $0x78] sm:$0xff]
  %v53 = vld [vmem:[%s0 + $0x80] sm:$0xff]
  %v54 = vld [vmem:[%s0 + $0x88] sm:$0xff]
  %v55 = vld [vmem:[%s0 + $0x90] sm:$0xff]
  %v56 = vld [vmem:[%s0 + $0x98] sm:$0xff]
  %v57 = vld [vmem:[%s0 + $0xa0] sm:$0xff]
  %v58 = vld [vmem:[%s0 + $0xa8] sm:$0xff]
  %v59 = vld [vmem:[%s0 + $0xb0] sm:$0xff]
  %v60 = vld [vmem:[%s0 + $0xb8] sm:$0xff]
  %v61 = vld [vmem:[%s0 + $0xc0] sm:$0xff]
  %vm62 = vcmask 588800
  %v64 = vsel %vm62, %v24, 0
  %v67 = vsel %vm62, %v26, 0
  %v70 = vsel %vm62, %v28, 0
  %v73 = vsel %vm62, %v30, 0
  %v76 = vsel %vm62, %v32, 0
  %v79 = vsel %vm62, %v34, 0
  %v82 = vsel %vm62, %v36, 0
  %84 = vmatpush.msra.mxu0 %v52
  %85 = vmatpush.msra.mxu0 %v51
  %86 = vmatpush.msra.mxu0 %v50
  %87 = vmatpush.msra.mxu0 %v49
  %88 = vmatpush.msra.mxu0 %v48
  %89 = vmatpush.msra.mxu0 %v47
  %90 = vmatpush.msra.mxu0 %v46
  %91 = vmatpush.msra.mxu0 %v45
  %92 = vmatpush.msra.mxu0 %v44
  %93 = vmatpush.msra.mxu0 %v43
  %94 = vmatpush.msra.mxu0 %v42
  %95 = vmatpush.msra.mxu0 %v41
  %96 = vmatpush.msra.mxu0 %v40
  %97 = vmatpush.msra.mxu0 %v39
  %98 = vmatpush.msra.mxu0 %v38
  %99 = vmatpush.msra.mxu0 %v37
  %100 = vmatmul.f32.gmra.mxu0 %v23
  %v101 = vpop.f32.mrf.mxu0
  %v102 = vadd.f32 0.0, %v101
  %103 = vmatmul.f32.gmra.mxu0 %v25
  %v104 = vpop.f32.mrf.mxu0
  %v105 = vadd.f32 0.0, %v104
  %106 = vmatmul.f32.gmra.mxu0 %v27
  %v107 = vpop.f32.mrf.mxu0
  %v108 = vadd.f32 0.0, %v107
  %109 = vmatmul.f32.gmra.mxu0 %v29
  %v110 = vpop.f32.mrf.mxu0
  %v111 = vadd.f32 0.0, %v110
  %112 = vmatmul.f32.gmra.mxu0 %v31
  %v113 = vpop.f32.mrf.mxu0
  %v114 = vadd.f32 0.0, %v113
  %115 = vmatmul.f32.gmra.mxu0 %v33
  %v116 = vpop.f32.mrf.mxu0
  %v117 = vadd.f32 0.0, %v116
  %118 = vmatmul.f32.gmra.mxu0 %v35
  %v119 = vpop.f32.mrf.mxu0
  %v120 = vadd.f32 0.0, %v119
  %121 = vdwg.mxu0
  %122 = vmatpush.msra.mxu0 0.0
  %123 = vmatpush.msra.mxu0 0.0
  %124 = vmatpush.msra.mxu0 0.0
  %125 = vmatpush.msra.mxu0 0.0
  %126 = vmatpush.msra.mxu0 0.0
  %127 = vmatpush.msra.mxu0 0.0
  %128 = vmatpush.msra.mxu0 0.0
  %129 = vmatpush.msra.mxu0 %v61
  %130 = vmatpush.msra.mxu0 %v60
  %131 = vmatpush.msra.mxu0 %v59
  %132 = vmatpush.msra.mxu0 %v58
  %133 = vmatpush.msra.mxu0 %v57
  %134 = vmatpush.msra.mxu0 %v56
  %135 = vmatpush.msra.mxu0 %v55
  %136 = vmatpush.msra.mxu0 %v54
  %137 = vmatpush.msra.mxu0 %v53
  %138 = vmatmul.f32.gmra.mxu0 %v64
  %v139 = vpop.f32.mrf.mxu0
  %v140 = vadd.f32 %v102, %v139
  %141 = vmatmul.f32.gmra.mxu0 %v67
  %v142 = vpop.f32.mrf.mxu0
  %v143 = vadd.f32 %v105, %v142
  %144 = vmatmul.f32.gmra.mxu0 %v70
  %v145 = vpop.f32.mrf.mxu0
  %v146 = vadd.f32 %v108, %v145
  %147 = vmatmul.f32.gmra.mxu0 %v73
  %v148 = vpop.f32.mrf.mxu0
  %v149 = vadd.f32 %v111, %v148
  %150 = vmatmul.f32.gmra.mxu0 %v76
  %v151 = vpop.f32.mrf.mxu0
  %v152 = vadd.f32 %v114, %v151
  %153 = vmatmul.f32.gmra.mxu0 %v79
  %v154 = vpop.f32.mrf.mxu0
  %v155 = vadd.f32 %v117, %v154
  %156 = vmatmul.f32.gmra.mxu0 %v82
  %v157 = vpop.f32.mrf.mxu0
  %v158 = vadd.f32 %v120, %v157
  %159 = vdwg.mxu0
  %v160 = vld [vmem:[%s3] sm:$0xff]
  %v161 = vld [vmem:[%s3 + $0x8] sm:$0xff]
  %v162 = vld [vmem:[%s3 + $0x10] sm:$0xff]
  %v163 = vld [vmem:[%s3 + $0x18] sm:$0xff]
  %v164 = vld [vmem:[%s3 + $0x20] sm:$0xff]
  %v165 = vld [vmem:[%s3 + $0x28] sm:$0xff]
  %v166 = vld [vmem:[%s3 + $0x30] sm:$0xff]
  %v167 = vld [vmem:[%s3 + $0x38] sm:$0xff]
  %v168 = vld [vmem:[%s3 + $0x40] sm:$0xff]
  %v169 = vld [vmem:[%s3 + $0x48] sm:$0xff]
  %v170 = vld [vmem:[%s3 + $0x50] sm:$0xff]
  %v171 = vld [vmem:[%s3 + $0x58] sm:$0xff]
  %v172 = vld [vmem:[%s3 + $0x60] sm:$0x3]
  %v173 = vld [vmem:[%s3 + $0x68] sm:$0x3]
  %v175 = vsel %vm62, %v161, 0
  %v178 = vsel %vm62, %v163, 0
  %v181 = vsel %vm62, %v165, 0
  %v184 = vsel %vm62, %v167, 0
  %v187 = vsel %vm62, %v169, 0
  %v190 = vsel %vm62, %v171, 0
  %v193 = vsel %vm62, %v173, 0
  %195 = vmatpush.msra.mxu0 %v52
  %196 = vmatpush.msra.mxu0 %v51
  %197 = vmatpush.msra.mxu0 %v50
  %198 = vmatpush.msra.mxu0 %v49
  %199 = vmatpush.msra.mxu0 %v48
  %200 = vmatpush.msra.mxu0 %v47
  %201 = vmatpush.msra.mxu0 %v46
  %202 = vmatpush.msra.mxu0 %v45
  %203 = vmatpush.msra.mxu0 %v44
  %204 = vmatpush.msra.mxu0 %v43
  %205 = vmatpush.msra.mxu0 %v42
  %206 = vmatpush.msra.mxu0 %v41
  %207 = vmatpush.msra.mxu0 %v40
  %208 = vmatpush.msra.mxu0 %v39
  %209 = vmatpush.msra.mxu0 %v38
  %210 = vmatpush.msra.mxu0 %v37
  %211 = vmatmul.f32.gmra.mxu0 %v160
  %v212 = vpop.f32.mrf.mxu0
  %v213 = vadd.f32 0.0, %v212
  %214 = vmatmul.f32.gmra.mxu0 %v162
  %v215 = vpop.f32.mrf.mxu0
  %v216 = vadd.f32 0.0, %v215
  %217 = vmatmul.f32.gmra.mxu0 %v164
  %v218 = vpop.f32.mrf.mxu0
  %v219 = vadd.f32 0.0, %v218
  %220 = vmatmul.f32.gmra.mxu0 %v166
  %v221 = vpop.f32.mrf.mxu0
  %v222 = vadd.f32 0.0, %v221
  %223 = vmatmul.f32.gmra.mxu0 %v168
  %v224 = vpop.f32.mrf.mxu0
  %v225 = vadd.f32 0.0, %v224
  %226 = vmatmul.f32.gmra.mxu0 %v170
  %v227 = vpop.f32.mrf.mxu0
  %v228 = vadd.f32 0.0, %v227
  %229 = vmatmul.f32.gmra.mxu0 %v172
  %v230 = vpop.f32.mrf.mxu0
  %v231 = vadd.f32 0.0, %v230
  %232 = vdwg.mxu0
  %233 = vmatpush.msra.mxu0 0.0
  %234 = vmatpush.msra.mxu0 0.0
  %235 = vmatpush.msra.mxu0 0.0
  %236 = vmatpush.msra.mxu0 0.0
  %237 = vmatpush.msra.mxu0 0.0
  %238 = vmatpush.msra.mxu0 0.0
  %239 = vmatpush.msra.mxu0 0.0
  %240 = vmatpush.msra.mxu0 %v61
  %241 = vmatpush.msra.mxu0 %v60
  %242 = vmatpush.msra.mxu0 %v59
  %243 = vmatpush.msra.mxu0 %v58
  %244 = vmatpush.msra.mxu0 %v57
  %245 = vmatpush.msra.mxu0 %v56
  %246 = vmatpush.msra.mxu0 %v55
  %247 = vmatpush.msra.mxu0 %v54
  %248 = vmatpush.msra.mxu0 %v53
  %249 = vmatmul.f32.gmra.mxu0 %v175
  %v250 = vpop.f32.mrf.mxu0
  %v251 = vadd.f32 %v213, %v250
  %252 = vmatmul.f32.gmra.mxu0 %v178
  %v253 = vpop.f32.mrf.mxu0
  %v254 = vadd.f32 %v216, %v253
  %255 = vmatmul.f32.gmra.mxu0 %v181
  %v256 = vpop.f32.mrf.mxu0
  %v257 = vadd.f32 %v219, %v256
  %258 = vmatmul.f32.gmra.mxu0 %v184
  %v259 = vpop.f32.mrf.mxu0
  %v260 = vadd.f32 %v222, %v259
  %261 = vmatmul.f32.gmra.mxu0 %v187
  %v262 = vpop.f32.mrf.mxu0
  %v263 = vadd.f32 %v225, %v262
  %264 = vmatmul.f32.gmra.mxu0 %v190
  %v265 = vpop.f32.mrf.mxu0
  %v266 = vadd.f32 %v228, %v265
  %267 = vmatmul.f32.gmra.mxu0 %v193
  %v268 = vpop.f32.mrf.mxu0
  %v269 = vadd.f32 %v231, %v268
  %270 = vdwg.mxu0
  %v271 = vmax.f32 %v140, %v251
  %v272 = vmax.f32 %v143, %v254
  %v273 = vmax.f32 %v146, %v257
  %v274 = vmax.f32 %v149, %v260
  %v275 = vmax.f32 %v152, %v263
  %v276 = vmax.f32 %v155, %v266
  %v277 = vmax.f32 %v158, %v269
  %v278 = vld [vmem:[%s4] sm:$0xff]
  %v279 = vld [vmem:[%s4 + $0x8] sm:$0xff]
  %v280 = vld [vmem:[%s4 + $0x10] sm:$0xff]
  %v281 = vld [vmem:[%s4 + $0x18] sm:$0xff]
  %v282 = vld [vmem:[%s4 + $0x20] sm:$0xff]
  %v283 = vld [vmem:[%s4 + $0x28] sm:$0xff]
  %v284 = vld [vmem:[%s4 + $0x30] sm:$0xff]
  %v285 = vld [vmem:[%s4 + $0x38] sm:$0xff]
  %v286 = vld [vmem:[%s4 + $0x40] sm:$0xff]
  %v287 = vld [vmem:[%s4 + $0x48] sm:$0xff]
  %v288 = vld [vmem:[%s4 + $0x50] sm:$0xff]
  %v289 = vld [vmem:[%s4 + $0x58] sm:$0xff]
  %v290 = vld [vmem:[%s4 + $0x60] sm:$0x3]
  %v291 = vld [vmem:[%s4 + $0x68] sm:$0x3]
  %v293 = vsel %vm62, %v279, 0
  %v296 = vsel %vm62, %v281, 0
  %v299 = vsel %vm62, %v283, 0
  %v302 = vsel %vm62, %v285, 0
  %v305 = vsel %vm62, %v287, 0
  %v308 = vsel %vm62, %v289, 0
  %v311 = vsel %vm62, %v291, 0
  %313 = vmatpush.msra.mxu0 %v52
  %314 = vmatpush.msra.mxu0 %v51
  %315 = vmatpush.msra.mxu0 %v50
  %316 = vmatpush.msra.mxu0 %v49
  %317 = vmatpush.msra.mxu0 %v48
  %318 = vmatpush.msra.mxu0 %v47
  %319 = vmatpush.msra.mxu0 %v46
  %320 = vmatpush.msra.mxu0 %v45
  %321 = vmatpush.msra.mxu0 %v44
  %322 = vmatpush.msra.mxu0 %v43
  %323 = vmatpush.msra.mxu0 %v42
  %324 = vmatpush.msra.mxu0 %v41
  %325 = vmatpush.msra.mxu0 %v40
  %326 = vmatpush.msra.mxu0 %v39
  %327 = vmatpush.msra.mxu0 %v38
  %328 = vmatpush.msra.mxu0 %v37
  %329 = vmatmul.f32.gmra.mxu0 %v278
  %v330 = vpop.f32.mrf.mxu0
  %v331 = vadd.f32 0.0, %v330
  %332 = vmatmul.f32.gmra.mxu0 %v280
  %v333 = vpop.f32.mrf.mxu0
  %v334 = vadd.f32 0.0, %v333
  %335 = vmatmul.f32.gmra.mxu0 %v282
  %v336 = vpop.f32.mrf.mxu0
  %v337 = vadd.f32 0.0, %v336
  %338 = vmatmul.f32.gmra.mxu0 %v284
  %v339 = vpop.f32.mrf.mxu0
  %v340 = vadd.f32 0.0, %v339
  %341 = vmatmul.f32.gmra.mxu0 %v286
  %v342 = vpop.f32.mrf.mxu0
  %v343 = vadd.f32 0.0, %v342
  %344 = vmatmul.f32.gmra.mxu0 %v288
  %v345 = vpop.f32.mrf.mxu0
  %v346 = vadd.f32 0.0, %v345
  %347 = vmatmul.f32.gmra.mxu0 %v290
  %v348 = vpop.f32.mrf.mxu0
  %v349 = vadd.f32 0.0, %v348
  %350 = vdwg.mxu0
  %351 = vmatpush.msra.mxu0 0.0
  %352 = vmatpush.msra.mxu0 0.0
  %353 = vmatpush.msra.mxu0 0.0
  %354 = vmatpush.msra.mxu0 0.0
  %355 = vmatpush.msra.mxu0 0.0
  %356 = vmatpush.msra.mxu0 0.0
  %357 = vmatpush.msra.mxu0 0.0
  %358 = vmatpush.msra.mxu0 %v61
  %359 = vmatpush.msra.mxu0 %v60
  %360 = vmatpush.msra.mxu0 %v59
  %361 = vmatpush.msra.mxu0 %v58
  %362 = vmatpush.msra.mxu0 %v57
  %363 = vmatpush.msra.mxu0 %v56
  %364 = vmatpush.msra.mxu0 %v55
  %365 = vmatpush.msra.mxu0 %v54
  %366 = vmatpush.msra.mxu0 %v53
  %367 = vmatmul.f32.gmra.mxu0 %v293
  %v368 = vpop.f32.mrf.mxu0
  %v369 = vadd.f32 %v331, %v368
  %370 = vmatmul.f32.gmra.mxu0 %v296
  %v371 = vpop.f32.mrf.mxu0
  %v372 = vadd.f32 %v334, %v371
  %373 = vmatmul.f32.gmra.mxu0 %v299
  %v374 = vpop.f32.mrf.mxu0
  %v375 = vadd.f32 %v337, %v374
  %376 = vmatmul.f32.gmra.mxu0 %v302
  %v377 = vpop.f32.mrf.mxu0
  %v378 = vadd.f32 %v340, %v377
  %379 = vmatmul.f32.gmra.mxu0 %v305
  %v380 = vpop.f32.mrf.mxu0
  %v381 = vadd.f32 %v343, %v380
  %382 = vmatmul.f32.gmra.mxu0 %v308
  %v383 = vpop.f32.mrf.mxu0
  %v384 = vadd.f32 %v346, %v383
  %385 = vmatmul.f32.gmra.mxu0 %v311
  %v386 = vpop.f32.mrf.mxu0
  %v387 = vadd.f32 %v349, %v386
  %388 = vdwg.mxu0
  %v389 = vld [vmem:[%s5] sm:$0xff]
  %v390 = vld [vmem:[%s5 + $0x8] sm:$0xff]
  %v391 = vld [vmem:[%s5 + $0x10] sm:$0xff]
  %v392 = vld [vmem:[%s5 + $0x18] sm:$0xff]
  %v393 = vld [vmem:[%s5 + $0x20] sm:$0xff]
  %v394 = vld [vmem:[%s5 + $0x28] sm:$0xff]
  %v395 = vld [vmem:[%s5 + $0x30] sm:$0xff]
  %v396 = vld [vmem:[%s5 + $0x38] sm:$0xff]
  %v397 = vld [vmem:[%s5 + $0x40] sm:$0xff]
  %v398 = vld [vmem:[%s5 + $0x48] sm:$0xff]
  %v399 = vld [vmem:[%s5 + $0x50] sm:$0xff]
  %v400 = vld [vmem:[%s5 + $0x58] sm:$0xff]
  %v401 = vld [vmem:[%s5 + $0x60] sm:$0x3]
  %v402 = vld [vmem:[%s5 + $0x68] sm:$0x3]
  %v404 = vsel %vm62, %v390, 0
  %v407 = vsel %vm62, %v392, 0
  %v410 = vsel %vm62, %v394, 0
  %v413 = vsel %vm62, %v396, 0
  %v416 = vsel %vm62, %v398, 0
  %v419 = vsel %vm62, %v400, 0
  %v422 = vsel %vm62, %v402, 0
  %424 = vmatpush.msra.mxu0 %v52
  %425 = vmatpush.msra.mxu0 %v51
  %426 = vmatpush.msra.mxu0 %v50
  %427 = vmatpush.msra.mxu0 %v49
  %428 = vmatpush.msra.mxu0 %v48
  %429 = vmatpush.msra.mxu0 %v47
  %430 = vmatpush.msra.mxu0 %v46
  %431 = vmatpush.msra.mxu0 %v45
  %432 = vmatpush.msra.mxu0 %v44
  %433 = vmatpush.msra.mxu0 %v43
  %434 = vmatpush.msra.mxu0 %v42
  %435 = vmatpush.msra.mxu0 %v41
  %436 = vmatpush.msra.mxu0 %v40
  %437 = vmatpush.msra.mxu0 %v39
  %438 = vmatpush.msra.mxu0 %v38
  %439 = vmatpush.msra.mxu0 %v37
  %440 = vmatmul.f32.gmra.mxu0 %v389
  %v441 = vpop.f32.mrf.mxu0
  %v442 = vadd.f32 0.0, %v441
  %443 = vmatmul.f32.gmra.mxu0 %v391
  %v444 = vpop.f32.mrf.mxu0
  %v445 = vadd.f32 0.0, %v444
  %446 = vmatmul.f32.gmra.mxu0 %v393
  %v447 = vpop.f32.mrf.mxu0
  %v448 = vadd.f32 0.0, %v447
  %449 = vmatmul.f32.gmra.mxu0 %v395
  %v450 = vpop.f32.mrf.mxu0
  %v451 = vadd.f32 0.0, %v450
  %452 = vmatmul.f32.gmra.mxu0 %v397
  %v453 = vpop.f32.mrf.mxu0
  %v454 = vadd.f32 0.0, %v453
  %455 = vmatmul.f32.gmra.mxu0 %v399
  %v456 = vpop.f32.mrf.mxu0
  %v457 = vadd.f32 0.0, %v456
  %458 = vmatmul.f32.gmra.mxu0 %v401
  %v459 = vpop.f32.mrf.mxu0
  %v460 = vadd.f32 0.0, %v459
  %461 = vdwg.mxu0
  %462 = vmatpush.msra.mxu0 0.0
  %463 = vmatpush.msra.mxu0 0.0
  %464 = vmatpush.msra.mxu0 0.0
  %465 = vmatpush.msra.mxu0 0.0
  %466 = vmatpush.msra.mxu0 0.0
  %467 = vmatpush.msra.mxu0 0.0
  %468 = vmatpush.msra.mxu0 0.0
  %469 = vmatpush.msra.mxu0 %v61
  %470 = vmatpush.msra.mxu0 %v60
  %471 = vmatpush.msra.mxu0 %v59
  %472 = vmatpush.msra.mxu0 %v58
  %473 = vmatpush.msra.mxu0 %v57
  %474 = vmatpush.msra.mxu0 %v56
  %475 = vmatpush.msra.mxu0 %v55
  %476 = vmatpush.msra.mxu0 %v54
  %477 = vmatpush.msra.mxu0 %v53
  %478 = vmatmul.f32.gmra.mxu0 %v404
  %v479 = vpop.f32.mrf.mxu0
  %v480 = vadd.f32 %v442, %v479
  %481 = vmatmul.f32.gmra.mxu0 %v407
  %v482 = vpop.f32.mrf.mxu0
  %v483 = vadd.f32 %v445, %v482
  %484 = vmatmul.f32.gmra.mxu0 %v410
  %v485 = vpop.f32.mrf.mxu0
  %v486 = vadd.f32 %v448, %v485
  %487 = vmatmul.f32.gmra.mxu0 %v413
  %v488 = vpop.f32.mrf.mxu0
  %v489 = vadd.f32 %v451, %v488
  %490 = vmatmul.f32.gmra.mxu0 %v416
  %v491 = vpop.f32.mrf.mxu0
  %v492 = vadd.f32 %v454, %v491
  %493 = vmatmul.f32.gmra.mxu0 %v419
  %v494 = vpop.f32.mrf.mxu0
  %v495 = vadd.f32 %v457, %v494
  %496 = vmatmul.f32.gmra.mxu0 %v422
  %v497 = vpop.f32.mrf.mxu0
  %v498 = vadd.f32 %v460, %v497
  %499 = vdwg.mxu0
  %v500 = vmax.f32 %v369, %v480
  %v501 = vmax.f32 %v372, %v483
  %v502 = vmax.f32 %v375, %v486
  %v503 = vmax.f32 %v378, %v489
  %v504 = vmax.f32 %v381, %v492
  %v505 = vmax.f32 %v384, %v495
  %v506 = vmax.f32 %v387, %v498
  %v507 = vmax.f32 %v271, %v500
  %v508 = vmax.f32 %v272, %v501
  %v509 = vmax.f32 %v273, %v502
  %v510 = vmax.f32 %v274, %v503
  %v511 = vmax.f32 %v275, %v504
  %v512 = vmax.f32 %v276, %v505
  %v513 = vmax.f32 %v277, %v506
  %v514 = vld [vmem:[%s1] sm:$0x1]
  %v516 = vperm.slane %v514, 0
  %v518 = vadd.f32 %v507, %v516
  %v519 = vadd.f32 %v508, %v516
  %v520 = vadd.f32 %v509, %v516
  %v521 = vadd.f32 %v510, %v516
  %v522 = vadd.f32 %v511, %v516
  %v523 = vadd.f32 %v512, %v516
  %v524 = vadd.f32 %v513, %v516
  %v525 = vmax.f32 %v518, 0.0
  %v526 = vmax.f32 %v519, 0.0
  %v527 = vmax.f32 %v520, 0.0
  %v528 = vmax.f32 %v521, 0.0
  %v529 = vmax.f32 %v522, 0.0
  %v530 = vmax.f32 %v523, 0.0
  %v531 = vmax.f32 %v524, 0.0
  %vm532 = vcmask 64512
  %533 = vst.msk [vmem:[%s6] sm:$0xff] %vm532, %v525
  %534 = vst.msk [vmem:[%s6 + $0x8] sm:$0xff] %vm532, %v526
  %535 = vst.msk [vmem:[%s6 + $0x10] sm:$0xff] %vm532, %v527
  %536 = vst.msk [vmem:[%s6 + $0x18] sm:$0xff] %vm532, %v528
  %537 = vst.msk [vmem:[%s6 + $0x20] sm:$0xff] %vm532, %v529
  %538 = vst.msk [vmem:[%s6 + $0x28] sm:$0xff] %vm532, %v530
  %vm539 = vcmask 58368
  %540 = vst.msk [vmem:[%s6 + $0x30] sm:$0x3] %vm539, %v531
  // Predicated region
  $region26: #{seqconvnet_forward.4} parent=0 // pred_check
    _
  $region27: #{seqconvnet_forward.4} parent=0 // pred_check_branch
    %542 = sbr.rel (0) target = $region29
  $region28: #{seqconvnet_forward.4} parent=0 // pred_region
    _
  $region29: #{seqconvnet_forward.4} parent=0 // pred_fallthru
    _
  // Predicated region
  $region30: #{seqconvnet_forward.4} parent=0 // pred_check
    _
  $region31: #{seqconvnet_forward.4} parent=0 // pred_check_branch
    %544 = sbr.rel (0) target = $region33
  $region32: #{seqconvnet_forward.4} parent=0 // pred_region
    _
  $region33: #{seqconvnet_forward.4} parent=0 // pred_fallthru
    _

// kernel: seqconvnet_forward.5
$region0: #{seqconvnet_forward.5}
  #allocation0 [shape = 'u32[]', space=smem, size = 0x4, offset = 0x4, fixed_abs, tag = 'smem constant byte address 0x4 - core index']
  #allocation1 [shape = 'u32[72,128]{1,0:T(1,128)}', space=vmem, size = 0x9000, scoped, tag = 'internal scratch']
  %s0 = inlined_call_operand.vmem [shape: f32[2,200], index: 0, kind: input, shape index: {}]
  %s1 = inlined_call_operand.vmem [shape: f32[200,32], index: 1, kind: input, shape index: {}]
  %s2 = inlined_call_operand.vmem [shape: f32[1,32], index: 2, kind: input, shape index: {}]
  %s3 = inlined_call_operand.vmem [shape: f32[32,16], index: 3, kind: input, shape index: {}]
  %s4 = inlined_call_operand.vmem [shape: f32[1,16], index: 4, kind: input, shape index: {}]
  %s5 = inlined_call_operand.vmem [shape: f32[16,10], index: 5, kind: input, shape index: {}]
  %s6 = inlined_call_operand.vmem [shape: f32[1,10], index: 6, kind: input, shape index: {}]
  %s7 = inlined_call_operand.hbm [shape: f32[2,10], index: 7, kind: output, shape index: {}]
  %s8 = sld [smem:[#allocation0]]
  $region38: #{seqconvnet_forward.5} parent=0
    _
  %s10 = ssub.s32 1, %s8
  %s11 = scalar_select 0, %s10, %s8
  $region1: #{seqconvnet_forward.5} parent=0
    #allocation2 [shape = 'u8[1024]{0}', space=vmem, size = 0x400, scoped, tag = 'output window, operand 0, single buffered']
    #allocation3 [shape = 's32[1]{0}', space=sflag, size = 0x4, scoped, tag = 'scoped memory for seqconvnet_forward.5']
    %12 = vsyncpa [#allocation3], 0
    // Predicated region
    $region2: #{seqconvnet_forward.5} parent=1 // pred_check
      _
    $region3: #{seqconvnet_forward.5} parent=1 // pred_check_branch
      %14 = sbr.rel (0) target = $region5
    $region4: #{seqconvnet_forward.5} parent=1 // pred_region
      _
    $region5: #{seqconvnet_forward.5} parent=1 // pred_fallthru
      _
    // Predicated region
    $region6: #{seqconvnet_forward.5} parent=1 // pred_check
      _
    $region7: #{seqconvnet_forward.5} parent=1 // pred_check_branch
      %16 = sbr.rel (0) target = $region9
    $region8: #{seqconvnet_forward.5} parent=1 // pred_region
      _
    $region9: #{seqconvnet_forward.5} parent=1 // pred_fallthru
      _
    // Predicated region
    $region10: #{seqconvnet_forward.5} parent=1 // pred_check
      _
    $region11: #{seqconvnet_forward.5} parent=1 // pred_check_branch
      %18 = sbr.rel (0) target = $region13
    $region12: #{seqconvnet_forward.5} parent=1 // pred_region
      _
    $region13: #{seqconvnet_forward.5} parent=1 // pred_fallthru
      _
    // Predicated region
    $region14: #{seqconvnet_forward.5} parent=1 // pred_check
      _
    $region15: #{seqconvnet_forward.5} parent=1 // pred_check_branch
      %20 = sbr.rel (0) target = $region17
    $region16: #{seqconvnet_forward.5} parent=1 // pred_region
      _
    $region17: #{seqconvnet_forward.5} parent=1 // pred_fallthru
      _
    // Predicated region
    $region18: #{seqconvnet_forward.5} parent=1 // pred_check
      _
    $region19: #{seqconvnet_forward.5} parent=1 // pred_check_branch
      %22 = sbr.rel (0) target = $region21
    $region20: #{seqconvnet_forward.5} parent=1 // pred_region
      _
    $region21: #{seqconvnet_forward.5} parent=1 // pred_fallthru
      _
    // Predicated region
    $region22: #{seqconvnet_forward.5} parent=1 // pred_check
      _
    $region23: #{seqconvnet_forward.5} parent=1 // pred_check_branch
      %24 = sbr.rel (0) target = $region25
    $region24: #{seqconvnet_forward.5} parent=1 // pred_region
      _
    $region25: #{seqconvnet_forward.5} parent=1 // pred_fallthru
      _
    // Predicated region
    $region26: #{seqconvnet_forward.5} parent=1 // pred_check
      _
    $region27: #{seqconvnet_forward.5} parent=1 // pred_check_branch
      %26 = sbr.rel (0) target = $region29
    $region28: #{seqconvnet_forward.5} parent=1 // pred_region
      _
    $region29: #{seqconvnet_forward.5} parent=1 // pred_fallthru
      _
    %v27 = vld [vmem:[%s0] sm:$0xf]
    %v28 = vld [vmem:[%s1] sm:$0xff]
    %v29 = vld [vmem:[%s1 + $0x8] sm:$0xff]
    %v30 = vld [vmem:[%s1 + $0x10] sm:$0xff]
    %v31 = vld [vmem:[%s1 + $0x18] sm:$0xff]
    %v32 = vld [vmem:[%s1 + $0x20] sm:$0xff]
    %v33 = vld [vmem:[%s1 + $0x28] sm:$0xff]
    %v34 = vld [vmem:[%s1 + $0x30] sm:$0xff]
    %v35 = vld [vmem:[%s1 + $0x38] sm:$0xff]
    %v36 = vld [vmem:[%s1 + $0x40] sm:$0xff]
    %v37 = vld [vmem:[%s1 + $0x48] sm:$0xff]
    %v38 = vld [vmem:[%s1 + $0x50] sm:$0xff]
    %v39 = vld [vmem:[%s1 + $0x58] sm:$0xff]
    %v40 = vld [vmem:[%s1 + $0x60] sm:$0xff]
    %v41 = vld [vmem:[%s1 + $0x68] sm:$0xff]
    %v42 = vld [vmem:[%s1 + $0x70] sm:$0xff]
    %v43 = vld [vmem:[%s1 + $0x78] sm:$0xff]
    %v44 = vld [vmem:[%s1 + $0x80] sm:$0xff]
    %v45 = vld [vmem:[%s1 + $0x88] sm:$0xff]
    %v46 = vld [vmem:[%s1 + $0x90] sm:$0xff]
    %v47 = vld [vmem:[%s1 + $0x98] sm:$0xff]
    %v48 = vld [vmem:[%s1 + $0xa0] sm:$0xff]
    %v49 = vld [vmem:[%s1 + $0xa8] sm:$0xff]
    %v50 = vld [vmem:[%s1 + $0xb0] sm:$0xff]
    %v51 = vld [vmem:[%s1 + $0xb8] sm:$0xff]
    %v52 = vld [vmem:[%s1 + $0xc0] sm:$0xff]
    %v53 = vld [vmem:[%s2] sm:$0x1]
    %v55 = vperm.slane %v53, 0
    %58 = vst [vmem:[#allocation1] ss:$4 sm:$0xff] %v27
    %v59 = vld.sshfl [vmem:[#allocation1] sm:$0xff pattern:$0x73625140]
    %v60 = vld.sshfl [vmem:[#allocation1 + $0x8] sm:$0xff pattern:$0x73625140]
    %vm62 = vcmask 588800
    %v63 = vsel %vm62, %v60, 0
    %65 = vmatpush.msra.mxu0 %v43
    %66 = vmatpush.msra.mxu0 %v42
    %67 = vmatpush.msra.mxu0 %v41
    %68 = vmatpush.msra.mxu0 %v40
    %69 = vmatpush.msra.mxu0 %v39
    %70 = vmatpush.msra.mxu0 %v38
    %71 = vmatpush.msra.mxu0 %v37
    %72 = vmatpush.msra.mxu0 %v36
    %73 = vmatpush.msra.mxu0 %v35
    %74 = vmatpush.msra.mxu0 %v34
    %75 = vmatpush.msra.mxu0 %v33
    %76 = vmatpush.msra.mxu0 %v32
    %77 = vmatpush.msra.mxu0 %v31
    %78 = vmatpush.msra.mxu0 %v30
    %79 = vmatpush.msra.mxu0 %v29
    %80 = vmatpush.msra.mxu0 %v28
    %81 = vmatmul.f32.gmra.mxu0 %v59
    %v82 = vpop.f32.mrf.mxu0
    %v83 = vadd.f32 %v55, %v82
    %84 = vdwg.mxu0
    %85 = vmatpush.msra.mxu0 0.0
    %86 = vmatpush.msra.mxu0 0.0
    %87 = vmatpush.msra.mxu0 0.0
    %88 = vmatpush.msra.mxu0 0.0
    %89 = vmatpush.msra.mxu0 0.0
    %90 = vmatpush.msra.mxu0 0.0
    %91 = vmatpush.msra.mxu0 0.0
    %92 = vmatpush.msra.mxu0 %v52
    %93 = vmatpush.msra.mxu0 %v51
    %94 = vmatpush.msra.mxu0 %v50
    %95 = vmatpush.msra.mxu0 %v49
    %96 = vmatpush.msra.mxu0 %v48
    %97 = vmatpush.msra.mxu0 %v47
    %98 = vmatpush.msra.mxu0 %v46
    %99 = vmatpush.msra.mxu0 %v45
    %100 = vmatpush.msra.mxu0 %v44
    %101 = vmatmul.f32.gmra.mxu0 %v63
    %v102 = vpop.f32.mrf.mxu0
    %v103 = vadd.f32 %v83, %v102
    %104 = vdwg.mxu0
    %v105 = vmax.f32 %v103, 0.0
    %v106 = vld [vmem:[%s3] sm:$0xff]
    %v107 = vld [vmem:[%s3 + $0x8] sm:$0xff]
    %v108 = vld [vmem:[%s3 + $0x10] sm:$0xff]
    %v109 = vld [vmem:[%s3 + $0x18] sm:$0xff]
    %v110 = vld [vmem:[%s4] sm:$0x1]
    %v112 = vperm.slane %v110, 0
    %vm114 = vcmask 261120
    %v116 = vsel %vm114, %v105, 0
    %118 = vmatpush.msra.mxu0 0.0
    %119 = vmatpush.msra.mxu0 0.0
    %120 = vmatpush.msra.mxu0 0.0
    %121 = vmatpush.msra.mxu0 0.0
    %122 = vmatpush.msra.mxu0 0.0
    %123 = vmatpush.msra.mxu0 0.0
    %124 = vmatpush.msra.mxu0 0.0
    %125 = vmatpush.msra.mxu0 0.0
    %126 = vmatpush.msra.mxu0 0.0
    %127 = vmatpush.msra.mxu0 0.0
    %128 = vmatpush.msra.mxu0 0.0
    %129 = vmatpush.msra.mxu0 0.0
    %130 = vmatpush.msra.mxu0 %v109
    %131 = vmatpush.msra.mxu0 %v108
    %132 = vmatpush.msra.mxu0 %v107
    %133 = vmatpush.msra.mxu0 %v106
    %134 = vmatmul.f32.gmra.mxu0 %v116
    %v135 = vpop.f32.mrf.mxu0
    %v136 = vadd.f32 %v112, %v135
    %137 = vdwg.mxu0
    %v138 = vmax.f32 %v136, 0.0
    %v139 = vld [vmem:[%s5] sm:$0xff]
    %v140 = vld [vmem:[%s5 + $0x8] sm:$0xff]
    %v141 = vld [vmem:[%s6] sm:$0x1]
    %v143 = vperm.slane %v141, 0
    %vm145 = vcmask 130048
    %v147 = vsel %vm145, %v138, 0
    %149 = vmatpush.msra.mxu0 0.0
    %150 = vmatpush.msra.mxu0 0.0
    %151 = vmatpush.msra.mxu0 0.0
    %152 = vmatpush.msra.mxu0 0.0
    %153 = vmatpush.msra.mxu0 0.0
    %154 = vmatpush.msra.mxu0 0.0
    %155 = vmatpush.msra.mxu0 0.0
    %156 = vmatpush.msra.mxu0 0.0
    %157 = vmatpush.msra.mxu0 0.0
    %158 = vmatpush.msra.mxu0 0.0
    %159 = vmatpush.msra.mxu0 0.0
    %160 = vmatpush.msra.mxu0 0.0
    %161 = vmatpush.msra.mxu0 0.0
    %162 = vmatpush.msra.mxu0 0.0
    %163 = vmatpush.msra.mxu0 %v140
    %164 = vmatpush.msra.mxu0 %v139
    %165 = vmatmul.f32.gmra.mxu0 %v147
    %v166 = vpop.f32.mrf.mxu0
    %v167 = vadd.f32 %v143, %v166
    %168 = vdwg.mxu0
    %vm169 = vcmask 74752
    %170 = vst.msk [vmem:[#allocation2] sm:$0x3] %vm169, %v167
    // Predicated region
    $region30: #{seqconvnet_forward.5} parent=1 // pred_check
      _
    $region31: #{seqconvnet_forward.5} parent=1 // pred_check_branch
      %172 = sbr.rel (0) target = $region33
    $region32: #{seqconvnet_forward.5} parent=1 // pred_region
      %174 = vsyncadd [#allocation3], 0
      %s176 = sshll.u32 [#allocation2], 4
      %s177 = int_to_ptr.vmem [resolvable:$true] %s176
      %s178 = sshll.u32 %s7, 4
      %s179 = int_to_ptr.hbm [resolvable:$true] %s178
      %181 = dma.vmem_to_hbm [thread:$0]  %s177, 32, %s179, [#allocation3]
    $region33: #{seqconvnet_forward.5} parent=1 // pred_fallthru
      _
    // Predicated region
    $region34: #{seqconvnet_forward.5} parent=1 // pred_check
      _
    $region35: #{seqconvnet_forward.5} parent=1 // pred_check_branch
      %183 = sbr.rel (0) target = $region37
    $region36: #{seqconvnet_forward.5} parent=1 // pred_region
      %185 = dma.done [#allocation3], 32
    $region37: #{seqconvnet_forward.5} parent=1 // pred_fallthru
      _
    %186 = vsyncpa [#allocation3], 1

</llo_original>
